<compile_context>
chip_gen: v6e
topology: v6e:2x2x1
jax: 0.10.0
libtpu: 0.0.40
codegen_flags: <defaults>
</compile_context>

<pallas_src>
import math

import jax
import jax.numpy as jnp
from jax.experimental import pallas as pl
from jax.experimental.pallas import tpu as pltpu

_LANE = 128      # lane width: last dim multiples of this give unmasked stores
_SUBLANE = 8     # sublane granularity for the second-to-last dim
_DEFAULT_VMEM_CAP = 64 * 1024 * 1024   # v7x per-TensorCore (most restrictive)


def _round_up(x, m):
    return (x + m - 1) // m * m


def _vmem_capacity_bytes():
    try:
        return int(pltpu.get_tpu_info().vmem_capacity_bytes)
    except Exception:
        return _DEFAULT_VMEM_CAP


def _pad_cols(a, cols):
    return a if a.shape[1] == cols else jnp.pad(a, ((0, 0), (0, cols - a.shape[1])))


def _pad_rows(a, rows):
    return a if a.shape[0] == rows else jnp.pad(a, ((0, rows - a.shape[0]), (0, 0)))


def _pick_batch_tile(B, block_b, per_row_bytes, act_budget_bytes):
    """Batch rows per grid step.

    Big tiles for HBM-roofline efficiency, but aim for >= ~8 grid steps at
    large B so the double-buffer pipeline and both v7x TensorCores stay busy;
    never below 128 rows (per-step overhead), and shrink if the activation
    tiles would not fit next to the resident weights in VMEM.
    """
    tb = -(-B // 8)                     # ~8 grid steps
    tb = max(tb, 128)                   # avoid tiny, overhead-dominated tiles
    tb = min(tb, block_b)
    tb = min(_round_up(tb, _SUBLANE), _round_up(B, _SUBLANE))
    while tb > _SUBLANE and tb * per_row_bytes > act_budget_bytes:
        tb = max(_SUBLANE, _round_up(tb // 2, _SUBLANE))
    return tb


# ----------------------------------------------------------------------------
# Kernels
# ----------------------------------------------------------------------------
def _ae_fused_kernel(x_ref, w1_ref, b1_ref, w2_ref, b2_ref, enc_ref, dec_ref):
    """One batch tile: enc = sigmoid(x@W1+b1); dec = sigmoid(enc@W2+b2)."""
    mx_dtype = w1_ref.dtype   # bf16 weights -> bf16 MXU inputs (all generations)

    # --- encoder ---
    h = jnp.dot(x_ref[...].astype(mx_dtype), w1_ref[...],
                preferred_element_type=jnp.float32)
    h = h + b1_ref[...].astype(jnp.float32)           # (1, h_p) broadcasts
    enc = 1.0 / (1.0 + jnp.exp(-h))                   # exp on EUP; f32 math (v5e-safe)
    enc_ref[...] = enc.astype(enc_ref.dtype)

    # --- decoder ---
    d = jnp.dot(enc.astype(mx_dtype), w2_ref[...],
                preferred_element_type=jnp.float32)
    d = d + b2_ref[...].astype(jnp.float32)           # (1, in_p) broadcasts
    dec_ref[...] = (1.0 / (1.0 + jnp.exp(-d))).astype(dec_ref.dtype)


def _linear_sigmoid_kernel(x_ref, w_ref, b_ref, o_ref, acc_ref):
    """o = sigmoid(x @ w + b) with reduction over grid axis 2 (f32 accumulator).

    Used when the weights are too large to be VMEM-resident.
    """
    k = pl.program_id(2)

    @pl.when(k == 0)
    def _():
        acc_ref[...] = jnp.zeros_like(acc_ref)

    acc_ref[...] += jnp.dot(x_ref[...].astype(w_ref.dtype), w_ref[...],
                            preferred_element_type=jnp.float32)

    @pl.when(k == pl.num_programs(2) - 1)
    def _():
        z = acc_ref[...] + b_ref[...].astype(jnp.float32)
        o_ref[...] = (1.0 / (1.0 + jnp.exp(-z))).astype(o_ref.dtype)


# ----------------------------------------------------------------------------
# Wrappers
# ----------------------------------------------------------------------------
def _linear_sigmoid(x, w, b, out_dtype, tb):
    """sigmoid(x @ w + b) streaming w in (tk, tn) tiles (weight-tiled fallback)."""
    B, K = x.shape
    _, N = w.shape        # K, N already padded to lane multiples by the caller
    tk = 512 if K % 512 == 0 else (256 if K % 256 == 0 else 128)
    tn = 512 if N % 512 == 0 else (256 if N % 256 == 0 else 128)

    x_item = jnp.dtype(x.dtype).itemsize
    w_item = jnp.dtype(w.dtype).itemsize
    o_item = jnp.dtype(out_dtype).itemsize
    cost = pl.CostEstimate(
        flops=int(2 * B * K * N),
        transcendentals=int(B * N),
        bytes_accessed=int(B * K * x_item + K * N * w_item
                           + N * jnp.dtype(b.dtype).itemsize + B * N * o_item),
    )

    return pl.pallas_call(
        _linear_sigmoid_kernel,
        out_shape=jax.ShapeDtypeStruct((B, N), out_dtype),
        grid=(pl.cdiv(B, tb), N // tn, K // tk),          # reduction axis last
        in_specs=[
            pl.BlockSpec((tb, tk), lambda i, j, k: (i, k)),
            pl.BlockSpec((tk, tn), lambda i, j, k: (k, j)),
            pl.BlockSpec((1, tn), lambda i, j, k: (0, j)),
        ],
        out_specs=pl.BlockSpec((tb, tn), lambda i, j, k: (i, j)),
        scratch_shapes=[pltpu.VMEM((tb, tn), jnp.float32)],
        compiler_params=pltpu.CompilerParams(
            dimension_semantics=("parallel", "parallel", "arbitrary")),
        cost_estimate=cost,
    )(x, w, b)


def ae_forward(x, w1_t, b1, w2_t, b2, *, block_b=1024, out_dtype=None,
               weight_budget_bytes=None):
    """Fused AE forward.

    Args:
      x:    [B, in_features]            (f32 or bf16; bf16 halves HBM traffic)
      w1_t: [in_features, h_features]   (PyTorch f1.weight transposed)
      b1:   [h_features]
      w2_t: [h_features, in_features]   (PyTorch f2.weight transposed)
      b2:   [in_features]
      block_b: max batch rows per grid step.
      out_dtype: dtype of encoded/decoded; defaults to x.dtype.
      weight_budget_bytes: VMEM budget for resident weights (None -> auto;
        set to 0 to force the weight-tiled fallback path).

    Returns:
      (encoded [B, h_features], decoded [B, in_features])
    """
    B, in_f = x.shape
    in_f_w, h_f = w1_t.shape
    assert in_f_w == in_f and w2_t.shape == (h_f, in_f)

    out_dtype = x.dtype if out_dtype is None else jnp.dtype(out_dtype)
    mx_dtype = w1_t.dtype

    in_p = _round_up(in_f, _LANE)
    h_p = _round_up(h_f, _LANE)

    # Feature dims are zero-padded only when misaligned (keeps outputs
    # lane-dense).  The batch dim is never padded: the grid uses pl.cdiv and
    # Pallas masks the ragged final block, so no wrapper-side HBM rewrite of x.
    xp = _pad_cols(x, in_p)
    w1p = _pad_rows(_pad_cols(w1_t, h_p), in_p)
    b1p = _pad_cols(jnp.reshape(b1, (1, h_f)), h_p)
    w2p = _pad_rows(_pad_cols(w2_t, in_p), h_p)
    b2p = _pad_cols(jnp.reshape(b2, (1, in_f)), in_p)

    x_item = jnp.dtype(xp.dtype).itemsize
    w_item = jnp.dtype(mx_dtype).itemsize
    b_item = jnp.dtype(b1p.dtype).itemsize
    o_item = jnp.dtype(out_dtype).itemsize

    vmem_cap = _vmem_capacity_bytes()
    weight_resident_bytes = (2 * in_p * h_p) * w_item + (h_p + in_p) * b_item
    if weight_budget_bytes is None:
        weight_budget_bytes = vmem_cap // 3
    use_resident = weight_resident_bytes <= weight_budget_bytes

    cost = pl.CostEstimate(
        flops=int(4 * B * in_f * h_f),
        transcendentals=int(B * (h_f + in_f)),
        bytes_accessed=int(B * in_f * x_item + 2 * in_f * h_f * w_item
                           + (h_f + in_f) * b_item + B * (h_f + in_f) * o_item),
    )

    if use_resident:
        # Per-row VMEM: double-buffered x/enc/dec tiles + in-kernel f32 temps.
        per_row = 2 * in_p * x_item + 2 * (h_p + in_p) * o_item + (h_p + in_p) * 8
        act_budget = max(vmem_cap // 2 - 2 * weight_resident_bytes,
                         2 * 1024 * 1024)
        tb = _pick_batch_tile(B, block_b, per_row, act_budget)

        # Right-sized VMEM limit (worst-case double-buffered weights) + 25%
        # headroom; only set when the defaults would be too small, and never
        # the full physical VMEM of a v7x core.
        need = 2 * weight_resident_bytes + tb * per_row
        vmem_limit = None
        if int(need * 1.25) > 16 * 1024 * 1024:
            vmem_limit = min(int(need * 1.25), vmem_cap - 4 * 1024 * 1024)

        def call(single_buffer_weights):
            if single_buffer_weights:
                # Constant index_map -> weights stay resident; single-buffered
                # so they don't take 2x VMEM.
                res = lambda s: pl.BlockSpec(s, lambda i: (0, 0),
                                             pipeline_mode=pl.Buffered(1))
            else:
                res = lambda s: pl.BlockSpec(s, lambda i: (0, 0))
            tiled = lambda s: pl.BlockSpec(s, lambda i: (i, 0))
            return pl.pallas_call(
                _ae_fused_kernel,
                out_shape=(jax.ShapeDtypeStruct((B, h_p), out_dtype),
                           jax.ShapeDtypeStruct((B, in_p), out_dtype)),
                grid=(pl.cdiv(B, tb),),
                in_specs=[
                    tiled((tb, in_p)),     # x tile (pipelined)
                    res((in_p, h_p)),      # W1 (resident)
                    res((1, h_p)),         # b1
                    res((h_p, in_p)),      # W2
                    res((1, in_p)),        # b2
                ],
                out_specs=(tiled((tb, h_p)), tiled((tb, in_p))),
                compiler_params=pltpu.CompilerParams(
                    dimension_semantics=("parallel",),   # megacore on v7x
                    vmem_limit_bytes=vmem_limit),
                cost_estimate=cost,
            )(xp, w1p, b1p, w2p, b2p)

        try:
            enc_p, dec_p = call(True)
        except Exception:
            # pipeline_mode/Buffered(1) unsupported on this JAX build:
            # fall back to default (double) buffering of the resident weights.
            enc_p, dec_p = call(False)
    else:
        # Weights cannot be VMEM-resident (e.g. sparse-AE h >> in on v7x's
        # 64 MiB VMEM): stream each weight matrix in (tk, tn) tiles with an
        # f32 accumulator over the reduction grid axis.
        per_row_fb = 2 * 512 * (x_item + o_item) + 512 * 4
        tb = _pick_batch_tile(B, block_b, per_row_fb, vmem_cap // 2)
        enc_p = _linear_sigmoid(xp, w1p, b1p, out_dtype, tb)
        dec_p = _linear_sigmoid(enc_p, w2p, b2p, out_dtype, tb)

    enc = enc_p if h_p == h_f else enc_p[:, :h_f]
    dec = dec_p if in_p == in_f else dec_p[:, :in_f]
    return enc, dec


def _reference(x, w1_t, b1, w2_t, b2):
    enc = jax.nn.sigmoid(
        jnp.dot(x, w1_t, precision=jax.lax.Precision.HIGHEST) + b1.reshape(1, -1))
    dec = jax.nn.sigmoid(
        jnp.dot(enc, w2_t, precision=jax.lax.Precision.HIGHEST) + b2.reshape(1, -1))
    return enc, dec


if __name__ == "__main__":
    batch = 512
    in_features = 256
    h_features = 128

    key = jax.random.PRNGKey(0)
    kx, kw1, kb1, kw2, kb2 = jax.random.split(key, 5)

    # PyTorch-Linear-style uniform init, weights stored pre-transposed.
    bound1 = 1.0 / math.sqrt(in_features)
    bound2 = 1.0 / math.sqrt(h_features)
    w1_t = jax.random.uniform(kw1, (in_features, h_features), jnp.float32,
                              -bound1, bound1)
    b1 = jax.random.uniform(kb1, (h_features,), jnp.float32, -bound1, bound1)
    w2_t = jax.random.uniform(kw2, (h_features, in_features), jnp.float32,
                              -bound2, bound2)
    b2 = jax.random.uniform(kb2, (in_features,), jnp.float32, -bound2, bound2)
    x = jax.random.normal(kx, (batch, in_features), jnp.float32)

    enc_ref, dec_ref = _reference(x, w1_t, b1, w2_t, b2)

    # 1) f32 I/O, fused kernel with resident single-buffered weights.
    encoded, decoded = ae_forward(x, w1_t, b1, w2_t, b2)
    jax.block_until_ready((encoded, decoded))
    assert encoded.shape == (batch, h_features)
    assert decoded.shape == (batch, in_features)
    # Tolerance covers MXU default-precision vs the HIGHEST-precision reference.
    assert jnp.allclose(encoded, enc_ref, atol=2e-3, rtol=2e-3)
    assert jnp.allclose(decoded, dec_ref, atol=2e-3, rtol=2e-3)

    # 2) bf16 I/O path: x, weights and outputs in bf16 at the pallas_call
    #    boundary (halves HBM bytes on all generations incl. v5e; sigmoid math
    #    stays f32 inside the kernel).
    enc_bf, dec_bf = ae_forward(x.astype(jnp.bfloat16),
                                w1_t.astype(jnp.bfloat16), b1,
                                w2_t.astype(jnp.bfloat16), b2)
    jax.block_until_ready((enc_bf, dec_bf))
    assert enc_bf.dtype == jnp.bfloat16 and dec_bf.dtype == jnp.bfloat16
    assert jnp.allclose(enc_bf.astype(jnp.float32), enc_ref, atol=3e-2, rtol=3e-2)
    assert jnp.allclose(dec_bf.astype(jnp.float32), dec_ref, atol=3e-2, rtol=3e-2)

    # 3) Forced weight-tiled fallback (the path used when W1/W2 cannot be
    #    VMEM-resident, e.g. large hidden sizes on v7x).
    enc_t, dec_t = ae_forward(x, w1_t, b1, w2_t, b2, weight_budget_bytes=0)
    jax.block_until_ready((enc_t, dec_t))
    assert jnp.allclose(enc_t, enc_ref, atol=2e-3, rtol=2e-3)
    assert jnp.allclose(dec_t, dec_ref, atol=2e-3, rtol=2e-3)

    # 4) Ragged / unaligned shapes: no batch padding (cdiv grid masks the last
    #    block), feature dims padded to lane multiples only where misaligned.
    Br, in_r, h_r = 100, 96, 200
    kr = jax.random.split(jax.random.PRNGKey(1), 5)
    w1r = jax.random.uniform(kr[1], (in_r, h_r), jnp.float32, -0.1, 0.1)
    b1r = jax.random.uniform(kr[2], (h_r,), jnp.float32, -0.1, 0.1)
    w2r = jax.random.uniform(kr[3], (h_r, in_r), jnp.float32, -0.1, 0.1)
    b2r = jax.random.uniform(kr[4], (in_r,), jnp.float32, -0.1, 0.1)
    xr = jax.random.normal(kr[0], (Br, in_r), jnp.float32)
    enc_rr, dec_rr = _reference(xr, w1r, b1r, w2r, b2r)
    enc_r, dec_r = ae_forward(xr, w1r, b1r, w2r, b2r)
    jax.block_until_ready((enc_r, dec_r))
    assert enc_r.shape == (Br, h_r) and dec_r.shape == (Br, in_r)
    assert jnp.allclose(enc_r, enc_rr, atol=2e-3, rtol=2e-3)
    assert jnp.allclose(dec_r, dec_rr, atol=2e-3, rtol=2e-3)

    # TODO(synk): train_lbfgs/train_adam (optimizer loops + file I/O),
    # infer()/infer_from_spectro() (conv2d + max_pool over reshaped filters,
    # disk pipelines), DeCov_loss and prune_weights are training/inference
    # utilities outside forward() and are not implemented as kernels here.
    print("KERNEL_OK")
</pallas_src>

<mosaic_0001>
module attributes {stable_mosaic.version = 11 : i64} {
  func.func @_ae_fused_kernel(%arg0: i32, %arg1: memref<128x256xf32, #tpu.memory_space<vmem>>, %arg2: memref<256x128xf32, #tpu.memory_space<vmem>>, %arg3: memref<1x128xf32, #tpu.memory_space<vmem>>, %arg4: memref<128x256xf32, #tpu.memory_space<vmem>>, %arg5: memref<1x256xf32, #tpu.memory_space<vmem>>, %arg6: memref<128x128xf32, #tpu.memory_space<vmem>>, %arg7: memref<128x256xf32, #tpu.memory_space<vmem>>) attributes {dimension_semantics = [#tpu.dimension_semantics<parallel>], iteration_bounds = array<i64: 4>, scalar_prefetch = 0 : i64, scratch_operands = 0 : i64, tpu.core_type = #tpu.core_type<tc>, window_params = [{transform_indices = @transform_0, window_bounds = array<i64: 128, 256>}, {pipeline_mode = #tpu.pipeline_mode<synchronous>, transform_indices = @transform_1, window_bounds = array<i64: 256, 128>}, {pipeline_mode = #tpu.pipeline_mode<synchronous>, transform_indices = @transform_2, window_bounds = array<i64: 1, 128>}, {pipeline_mode = #tpu.pipeline_mode<synchronous>, transform_indices = @transform_3, window_bounds = array<i64: 128, 256>}, {pipeline_mode = #tpu.pipeline_mode<synchronous>, transform_indices = @transform_4, window_bounds = array<i64: 1, 256>}, {transform_indices = @transform_5, window_bounds = array<i64: 128, 128>}, {transform_indices = @transform_6, window_bounds = array<i64: 128, 256>}]} {
    %c0 = arith.constant 0 : index
    %c0_0 = arith.constant 0 : index
    %0 = vector.load %arg1[%c0, %c0_0] : memref<128x256xf32, #tpu.memory_space<vmem>>, vector<128x256xf32>
    %c0_1 = arith.constant 0 : index
    %c0_2 = arith.constant 0 : index
    %1 = vector.load %arg2[%c0_1, %c0_2] : memref<256x128xf32, #tpu.memory_space<vmem>>, vector<256x128xf32>
    %cst = arith.constant dense<0.000000e+00> : vector<128x128xf32>
    %2 = tpu.matmul %0, %1, %cst {dimension_numbers = #tpu.dot_dimension_numbers<[1], [0], [0], [1], [0, 0, 1, 1], [], []>} : vector<128x256xf32>, vector<256x128xf32>, vector<128x128xf32> -> vector<128x128xf32>
    %c0_3 = arith.constant 0 : index
    %c0_4 = arith.constant 0 : index
    %3 = vector.load %arg3[%c0_3, %c0_4] : memref<1x128xf32, #tpu.memory_space<vmem>>, vector<1x128xf32>
    %4 = vector.broadcast %3 : vector<1x128xf32> to vector<128x128xf32>
    %5 = arith.addf %2, %4 : vector<128x128xf32>
    %cst_5 = arith.constant 0.000000e+00 : f32
    %6 = vector.broadcast %cst_5 : f32 to vector<128x128xf32>
    %7 = arith.subf %6, %5 : vector<128x128xf32>
    %8 = math.exp %7 : vector<128x128xf32>
    %cst_6 = arith.constant 1.000000e+00 : f32
    %9 = vector.broadcast %cst_6 : f32 to vector<128x128xf32>
    %10 = arith.addf %9, %8 : vector<128x128xf32>
    %cst_7 = arith.constant 1.000000e+00 : f32
    %11 = vector.broadcast %cst_7 : f32 to vector<128x128xf32>
    %12 = arith.divf %11, %10 : vector<128x128xf32>
    %c0_8 = arith.constant 0 : index
    %c0_9 = arith.constant 0 : index
    %13 = vector.load %arg6[%c0_8, %c0_9] : memref<128x128xf32, #tpu.memory_space<vmem>>, vector<128x128xf32>
    tpu.vector_store %arg6[%c0_8, %c0_9], %12 {strides = array<i32>} : memref<128x128xf32, #tpu.memory_space<vmem>>, vector<128x128xf32>,
    %c0_10 = arith.constant 0 : index
    %c0_11 = arith.constant 0 : index
    %14 = vector.load %arg4[%c0_10, %c0_11] : memref<128x256xf32, #tpu.memory_space<vmem>>, vector<128x256xf32>
    %cst_12 = arith.constant dense<0.000000e+00> : vector<128x256xf32>
    %15 = tpu.matmul %12, %14, %cst_12 {dimension_numbers = #tpu.dot_dimension_numbers<[1], [0], [0], [1], [0, 0, 1, 1], [], []>} : vector<128x128xf32>, vector<128x256xf32>, vector<128x256xf32> -> vector<128x256xf32>
    %c0_13 = arith.constant 0 : index
    %c0_14 = arith.constant 0 : index
    %16 = vector.load %arg5[%c0_13, %c0_14] : memref<1x256xf32, #tpu.memory_space<vmem>>, vector<1x256xf32>
    %17 = vector.broadcast %16 : vector<1x256xf32> to vector<128x256xf32>
    %18 = arith.addf %15, %17 : vector<128x256xf32>
    %cst_15 = arith.constant 0.000000e+00 : f32
    %19 = vector.broadcast %cst_15 : f32 to vector<128x256xf32>
    %20 = arith.subf %19, %18 : vector<128x256xf32>
    %21 = math.exp %20 : vector<128x256xf32>
    %cst_16 = arith.constant 1.000000e+00 : f32
    %22 = vector.broadcast %cst_16 : f32 to vector<128x256xf32>
    %23 = arith.addf %22, %21 : vector<128x256xf32>
    %cst_17 = arith.constant 1.000000e+00 : f32
    %24 = vector.broadcast %cst_17 : f32 to vector<128x256xf32>
    %25 = arith.divf %24, %23 : vector<128x256xf32>
    %c0_18 = arith.constant 0 : index
    %c0_19 = arith.constant 0 : index
    %26 = vector.load %arg7[%c0_18, %c0_19] : memref<128x256xf32, #tpu.memory_space<vmem>>, vector<128x256xf32>
    tpu.vector_store %arg7[%c0_18, %c0_19], %25 {strides = array<i32>} : memref<128x256xf32, #tpu.memory_space<vmem>>, vector<128x256xf32>,
    return
  }
  func.func @transform_0(%arg0: i32) -> (i32, i32) {
    %c0_i32 = arith.constant 0 : i32
    %c0_i32_0 = arith.constant 0 : i32
    return %arg0, %c0_i32 : i32, i32
  }
  func.func @transform_1(%arg0: i32) -> (i32, i32) {
    %c0_i32 = arith.constant 0 : i32
    %c0_i32_0 = arith.constant 0 : i32
    %c0_i32_1 = arith.constant 0 : i32
    return %c0_i32, %c0_i32_0 : i32, i32
  }
  func.func @transform_2(%arg0: i32) -> (i32, i32) {
    %c0_i32 = arith.constant 0 : i32
    %c0_i32_0 = arith.constant 0 : i32
    %c0_i32_1 = arith.constant 0 : i32
    return %c0_i32, %c0_i32_0 : i32, i32
  }
  func.func @transform_3(%arg0: i32) -> (i32, i32) {
    %c0_i32 = arith.constant 0 : i32
    %c0_i32_0 = arith.constant 0 : i32
    %c0_i32_1 = arith.constant 0 : i32
    return %c0_i32, %c0_i32_0 : i32, i32
  }
  func.func @transform_4(%arg0: i32) -> (i32, i32) {
    %c0_i32 = arith.constant 0 : i32
    %c0_i32_0 = arith.constant 0 : i32
    %c0_i32_1 = arith.constant 0 : i32
    return %c0_i32, %c0_i32_0 : i32, i32
  }
  func.func @transform_5(%arg0: i32) -> (i32, i32) {
    %c0_i32 = arith.constant 0 : i32
    %c0_i32_0 = arith.constant 0 : i32
    return %arg0, %c0_i32 : i32, i32
  }
  func.func @transform_6(%arg0: i32) -> (i32, i32) {
    %c0_i32 = arith.constant 0 : i32
    %c0_i32_0 = arith.constant 0 : i32
    return %arg0, %c0_i32 : i32, i32
  }
}

module attributes {stable_mosaic.version = 11 : i64} {
  func.func @_ae_fused_kernel(%arg0: i32, %arg1: memref<128x256xf32, #tpu.memory_space<vmem>>, %arg2: memref<256x128xf32, #tpu.memory_space<vmem>>, %arg3: memref<1x128xf32, #tpu.memory_space<vmem>>, %arg4: memref<128x256xf32, #tpu.memory_space<vmem>>, %arg5: memref<1x256xf32, #tpu.memory_space<vmem>>, %arg6: memref<128x128xf32, #tpu.memory_space<vmem>>, %arg7: memref<128x256xf32, #tpu.memory_space<vmem>>) attributes {dimension_semantics = [#tpu.dimension_semantics<parallel>], iteration_bounds = array<i64: 4>, scalar_prefetch = 0 : i64, scratch_operands = 0 : i64, tpu.core_type = #tpu.core_type<tc>, window_params = [{transform_indices = @transform_0, window_bounds = array<i64: 128, 256>}, {pipeline_mode = #tpu.pipeline_mode<synchronous>, transform_indices = @transform_1, window_bounds = array<i64: 256, 128>}, {pipeline_mode = #tpu.pipeline_mode<synchronous>, transform_indices = @transform_2, window_bounds = array<i64: 1, 128>}, {pipeline_mode = #tpu.pipeline_mode<synchronous>, transform_indices = @transform_3, window_bounds = array<i64: 128, 256>}, {pipeline_mode = #tpu.pipeline_mode<synchronous>, transform_indices = @transform_4, window_bounds = array<i64: 1, 256>}, {transform_indices = @transform_5, window_bounds = array<i64: 128, 128>}, {transform_indices = @transform_6, window_bounds = array<i64: 128, 256>}]} {
    %c0 = arith.constant 0 : index
    %c0_0 = arith.constant 0 : index
    %0 = vector.load %arg1[%c0, %c0_0] : memref<128x256xf32, #tpu.memory_space<vmem>>, vector<128x256xf32>
    %c0_1 = arith.constant 0 : index
    %c0_2 = arith.constant 0 : index
    %1 = vector.load %arg2[%c0_1, %c0_2] : memref<256x128xf32, #tpu.memory_space<vmem>>, vector<256x128xf32>
    %cst = arith.constant dense<0.000000e+00> : vector<128x128xf32>
    %2 = tpu.matmul %0, %1, %cst {dimension_numbers = #tpu.dot_dimension_numbers<[1], [0], [0], [1], [0, 0, 1, 1], [], []>} : vector<128x256xf32>, vector<256x128xf32>, vector<128x128xf32> -> vector<128x128xf32>
    %c0_3 = arith.constant 0 : index
    %c0_4 = arith.constant 0 : index
    %3 = vector.load %arg3[%c0_3, %c0_4] : memref<1x128xf32, #tpu.memory_space<vmem>>, vector<1x128xf32>
    %4 = vector.broadcast %3 : vector<1x128xf32> to vector<128x128xf32>
    %5 = arith.addf %2, %4 : vector<128x128xf32>
    %cst_5 = arith.constant 0.000000e+00 : f32
    %6 = vector.broadcast %cst_5 : f32 to vector<128x128xf32>
    %7 = arith.subf %6, %5 : vector<128x128xf32>
    %8 = math.exp %7 : vector<128x128xf32>
    %cst_6 = arith.constant 1.000000e+00 : f32
    %9 = vector.broadcast %cst_6 : f32 to vector<128x128xf32>
    %10 = arith.addf %9, %8 : vector<128x128xf32>
    %cst_7 = arith.constant 1.000000e+00 : f32
    %11 = vector.broadcast %cst_7 : f32 to vector<128x128xf32>
    %12 = arith.divf %11, %10 : vector<128x128xf32>
    %c0_8 = arith.constant 0 : index
    %c0_9 = arith.constant 0 : index
    %13 = vector.load %arg6[%c0_8, %c0_9] : memref<128x128xf32, #tpu.memory_space<vmem>>, vector<128x128xf32>
    tpu.vector_store %arg6[%c0_8, %c0_9], %12 {strides = array<i32>} : memref<128x128xf32, #tpu.memory_space<vmem>>, vector<128x128xf32>,
    %c0_10 = arith.constant 0 : index
    %c0_11 = arith.constant 0 : index
    %14 = vector.load %arg4[%c0_10, %c0_11] : memref<128x256xf32, #tpu.memory_space<vmem>>, vector<128x256xf32>
    %cst_12 = arith.constant dense<0.000000e+00> : vector<128x256xf32>
    %15 = tpu.matmul %12, %14, %cst_12 {dimension_numbers = #tpu.dot_dimension_numbers<[1], [0], [0], [1], [0, 0, 1, 1], [], []>} : vector<128x128xf32>, vector<128x256xf32>, vector<128x256xf32> -> vector<128x256xf32>
    %c0_13 = arith.constant 0 : index
    %c0_14 = arith.constant 0 : index
    %16 = vector.load %arg5[%c0_13, %c0_14] : memref<1x256xf32, #tpu.memory_space<vmem>>, vector<1x256xf32>
    %17 = vector.broadcast %16 : vector<1x256xf32> to vector<128x256xf32>
    %18 = arith.addf %15, %17 : vector<128x256xf32>
    %cst_15 = arith.constant 0.000000e+00 : f32
    %19 = vector.broadcast %cst_15 : f32 to vector<128x256xf32>
    %20 = arith.subf %19, %18 : vector<128x256xf32>
    %21 = math.exp %20 : vector<128x256xf32>
    %cst_16 = arith.constant 1.000000e+00 : f32
    %22 = vector.broadcast %cst_16 : f32 to vector<128x256xf32>
    %23 = arith.addf %22, %21 : vector<128x256xf32>
    %cst_17 = arith.constant 1.000000e+00 : f32
    %24 = vector.broadcast %cst_17 : f32 to vector<128x256xf32>
    %25 = arith.divf %24, %23 : vector<128x256xf32>
    %c0_18 = arith.constant 0 : index
    %c0_19 = arith.constant 0 : index
    %26 = vector.load %arg7[%c0_18, %c0_19] : memref<128x256xf32, #tpu.memory_space<vmem>>, vector<128x256xf32>
    tpu.vector_store %arg7[%c0_18, %c0_19], %25 {strides = array<i32>} : memref<128x256xf32, #tpu.memory_space<vmem>>, vector<128x256xf32>,
    return
  }
  func.func @transform_0(%arg0: i32) -> (i32, i32) {
    %c0_i32 = arith.constant 0 : i32
    %c0_i32_0 = arith.constant 0 : i32
    return %arg0, %c0_i32 : i32, i32
  }
  func.func @transform_1(%arg0: i32) -> (i32, i32) {
    %c0_i32 = arith.constant 0 : i32
    %c0_i32_0 = arith.constant 0 : i32
    %c0_i32_1 = arith.constant 0 : i32
    return %c0_i32, %c0_i32_0 : i32, i32
  }
  func.func @transform_2(%arg0: i32) -> (i32, i32) {
    %c0_i32 = arith.constant 0 : i32
    %c0_i32_0 = arith.constant 0 : i32
    %c0_i32_1 = arith.constant 0 : i32
    return %c0_i32, %c0_i32_0 : i32, i32
  }
  func.func @transform_3(%arg0: i32) -> (i32, i32) {
    %c0_i32 = arith.constant 0 : i32
    %c0_i32_0 = arith.constant 0 : i32
    %c0_i32_1 = arith.constant 0 : i32
    return %c0_i32, %c0_i32_0 : i32, i32
  }
  func.func @transform_4(%arg0: i32) -> (i32, i32) {
    %c0_i32 = arith.constant 0 : i32
    %c0_i32_0 = arith.constant 0 : i32
    %c0_i32_1 = arith.constant 0 : i32
    return %c0_i32, %c0_i32_0 : i32, i32
  }
  func.func @transform_5(%arg0: i32) -> (i32, i32) {
    %c0_i32 = arith.constant 0 : i32
    %c0_i32_0 = arith.constant 0 : i32
    return %arg0, %c0_i32 : i32, i32
  }
  func.func @transform_6(%arg0: i32) -> (i32, i32) {
    %c0_i32 = arith.constant 0 : i32
    %c0_i32_0 = arith.constant 0 : i32
    return %arg0, %c0_i32 : i32, i32
  }
}

</mosaic_0001>

<llo_original>
// kernel: tpu_custom_call.1
$region0: #{tpu_custom_call.1}
  #allocation0 [shape = 'u32[]', space=smem, size = 0x4, offset = 0x4, fixed_abs, tag = 'smem constant byte address 0x4 - core index']
  #allocation1 [shape = 'u32[144,128]{1,0:T(1,128)}', space=vmem, size = 0x12000, scoped, tag = 'internal scratch']
  %s0 = inlined_call_operand.hbm [shape: f32[512,256], index: 0, kind: input, shape index: {}]
  %s1 = inlined_call_operand.hbm [shape: f32[256,128], index: 1, kind: input, shape index: {}]
  %s2 = inlined_call_operand.vmem [shape: f32[1,128], index: 2, kind: input, shape index: {}]
  %s3 = inlined_call_operand.hbm [shape: f32[128,256], index: 3, kind: input, shape index: {}]
  %s4 = inlined_call_operand.vmem [shape: f32[1,256], index: 4, kind: input, shape index: {}]
  %s5 = inlined_call_operand.hbm [shape: f32[512,128], index: 5, kind: output, shape index: {0}]
  %s6 = inlined_call_operand.hbm [shape: f32[512,256], index: 6, kind: output, shape index: {1}]
  %7 = xla_tuple %s5, %s6
  %s8 = sld [smem:[#allocation0]]
  $region73: #{tpu_custom_call.1} parent=0
    _
  %s10 = ssub.s32 1, %s8
  %s11 = scalar_select 0, %s10, %s8
  $region1: #{tpu_custom_call.1} parent=0
    #allocation2 [shape = 'u8[262144]{0}', space=vmem, size = 0x40000, scoped, tag = 'input window, operand 0']
    #allocation3 [shape = 's32[2]{0}', space=sflag, size = 0x8, scoped, tag = 'scoped memory for tpu_custom_call.1']
    #allocation4 [shape = 's32[2]{0}', space=sflag, size = 0x8, scoped, tag = 'scoped memory for tpu_custom_call.1']
    #allocation5 [shape = 'u8[131072]{0}', space=vmem, size = 0x20000, scoped, tag = 'input window, operand 1, single buffered']
    #allocation6 [shape = 's32[1]{0}', space=sflag, size = 0x4, scoped, tag = 'scoped memory for tpu_custom_call.1']
    #allocation7 [shape = 'u8[131072]{0}', space=vmem, size = 0x20000, scoped, tag = 'input window, operand 3, single buffered']
    #allocation8 [shape = 'u8[131072]{0}', space=vmem, size = 0x20000, scoped, tag = 'output window, operand 0']
    #allocation9 [shape = 'u8[262144]{0}', space=vmem, size = 0x40000, scoped, tag = 'output window, operand 1']
    #allocation10 [shape = 's32[2]{0}', space=sflag, size = 0x8, scoped, tag = 'scoped memory for tpu_custom_call.1']
    %12 = vsyncpa [#allocation3], 0
    %s13 = scalar_lea.sflag [#allocation3], 1
    %14 = vsyncpa %s13, 0
    %15 = vsyncpa [#allocation6], 0
    %16 = vsyncpa [#allocation4], 0
    %s17 = scalar_lea.sflag [#allocation4], 1
    %18 = vsyncpa %s17, 0
    %19 = vsyncpa [#allocation10], 0
    %s20 = scalar_lea.sflag [#allocation10], 1
    %21 = vsyncpa %s20, 0
    loop: start=0, step=1, limit=6
    $region2: #{tpu_custom_call.1} parent=1 // loop_pre_header
      _
    $region3: #{tpu_custom_call.1} parent=1 // loop_header
      %s23 = sphi 0, %s27
      %p24 = scmp.ge.s32.totalorder %s23, 6
      %s33 = sphi 0, %s35
      %s36 = sphi 0, %s33
      %s37 = sphi 0, %s36
      %s53 = sphi 0, %s37
      %s57 = sphi 0, %s57
      %s59 = sphi 0, %s57
      %s60 = sphi 0, %s59
      %s74 = sphi 0, %s60
      %s78 = sphi 0, %s78
      %s80 = sphi 0, %s78
      %s81 = sphi 0, %s80
      %s95 = sphi 0, %s81
      %s99 = sphi 0, %s99
      %s101 = sphi 0, %s99
      %s102 = sphi 0, %s101
      %s116 = sphi 0, %s102
      %s120 = sphi 0, %s120
      %s122 = sphi 0, %s120
      %s123 = sphi 0, %s122
      %s137 = sphi 0, %s123
      %s143 = sphi 0, %s145
      %s146 = sphi 0, %s143
      %s147 = sphi 0, %s146
      %s163 = sphi 0, %s147
      %s169 = sphi 0, %s171
      %s172 = sphi 0, %s169
      %s173 = sphi 0, %s172
      %s189 = sphi 0, %s173
    $region4: #{tpu_custom_call.1} parent=1 // loop_header_branch
      %26 = sbr.rel (%p24) target = $region8
    $region5: #{tpu_custom_call.1} parent=1 // loop_body
      %s28 = ssub.s32 %s23, 1
      %s29 = ssub.s32 %s23, 2
      %s30 = sadd.s32 %s23, 1
      %s31 = ssub.s32 %s23, %s30
      %p32 = scmp.eq.s32.totalorder %s31, 0
      %s34 = sadd.s32 %s33, 1
      %s35 = scalar_select %p32, %s33, %s34
      %p38 = pneg %p32
      %p39 = scmp.eq.s32.totalorder %s23, 3
      %p40 = por %p38, %p39
      %p41 = scmp.ne.s32.totalorder %s33, %s36
      %p42 = scmp.eq.s32.totalorder %s23, 0
      %p43 = por %p41, %p42
      %p44 = scmp.ne.s32.totalorder %s33, %s36
      %p45 = scmp.eq.s32.totalorder %s28, 3
      %p46 = por %p44, %p45
      %p47 = scmp.ne.s32.totalorder %s36, %s37
      %p48 = scmp.eq.s32.totalorder %s28, 0
      %p49 = por %p47, %p48
      %p50 = scmp.ne.s32.totalorder %s36, %s37
      %p51 = scmp.eq.s32.totalorder %s29, 3
      %p52 = por %p50, %p51
      %p54 = scmp.ne.s32.totalorder %s37, %s53
      %p55 = scmp.eq.s32.totalorder %s29, 0
      %p56 = por %p54, %p55
      %s58 = sadd.s32 %s57, 1
      %p61 = scmp.eq.s32.totalorder %s23, 3
      %p62 = scmp.ne.s32.totalorder %s57, %s59
      %p63 = scmp.eq.s32.totalorder %s23, 0
      %p64 = por %p62, %p63
      %p65 = scmp.ne.s32.totalorder %s57, %s59
      %p66 = scmp.eq.s32.totalorder %s28, 3
      %p67 = por %p65, %p66
      %p68 = scmp.ne.s32.totalorder %s59, %s60
      %p69 = scmp.eq.s32.totalorder %s28, 0
      %p70 = por %p68, %p69
      %p71 = scmp.ne.s32.totalorder %s59, %s60
      %p72 = scmp.eq.s32.totalorder %s29, 3
      %p73 = por %p71, %p72
      %p75 = scmp.ne.s32.totalorder %s60, %s74
      %p76 = scmp.eq.s32.totalorder %s29, 0
      %p77 = por %p75, %p76
      %s79 = sadd.s32 %s78, 1
      %p82 = scmp.eq.s32.totalorder %s23, 3
      %p83 = scmp.ne.s32.totalorder %s78, %s80
      %p84 = scmp.eq.s32.totalorder %s23, 0
      %p85 = por %p83, %p84
      %p86 = scmp.ne.s32.totalorder %s78, %s80
      %p87 = scmp.eq.s32.totalorder %s28, 3
      %p88 = por %p86, %p87
      %p89 = scmp.ne.s32.totalorder %s80, %s81
      %p90 = scmp.eq.s32.totalorder %s28, 0
      %p91 = por %p89, %p90
      %p92 = scmp.ne.s32.totalorder %s80, %s81
      %p93 = scmp.eq.s32.totalorder %s29, 3
      %p94 = por %p92, %p93
      %p96 = scmp.ne.s32.totalorder %s81, %s95
      %p97 = scmp.eq.s32.totalorder %s29, 0
      %p98 = por %p96, %p97
      %s100 = sadd.s32 %s99, 1
      %p103 = scmp.eq.s32.totalorder %s23, 3
      %p104 = scmp.ne.s32.totalorder %s99, %s101
      %p105 = scmp.eq.s32.totalorder %s23, 0
      %p106 = por %p104, %p105
      %p107 = scmp.ne.s32.totalorder %s99, %s101
      %p108 = scmp.eq.s32.totalorder %s28, 3
      %p109 = por %p107, %p108
      %p110 = scmp.ne.s32.totalorder %s101, %s102
      %p111 = scmp.eq.s32.totalorder %s28, 0
      %p112 = por %p110, %p111
      %p113 = scmp.ne.s32.totalorder %s101, %s102
      %p114 = scmp.eq.s32.totalorder %s29, 3
      %p115 = por %p113, %p114
      %p117 = scmp.ne.s32.totalorder %s102, %s116
      %p118 = scmp.eq.s32.totalorder %s29, 0
      %p119 = por %p117, %p118
      %s121 = sadd.s32 %s120, 1
      %p124 = scmp.eq.s32.totalorder %s23, 3
      %p125 = scmp.ne.s32.totalorder %s120, %s122
      %p126 = scmp.eq.s32.totalorder %s23, 0
      %p127 = por %p125, %p126
      %p128 = scmp.ne.s32.totalorder %s120, %s122
      %p129 = scmp.eq.s32.totalorder %s28, 3
      %p130 = por %p128, %p129
      %p131 = scmp.ne.s32.totalorder %s122, %s123
      %p132 = scmp.eq.s32.totalorder %s28, 0
      %p133 = por %p131, %p132
      %p134 = scmp.ne.s32.totalorder %s122, %s123
      %p135 = scmp.eq.s32.totalorder %s29, 3
      %p136 = por %p134, %p135
      %p138 = scmp.ne.s32.totalorder %s123, %s137
      %p139 = scmp.eq.s32.totalorder %s29, 0
      %p140 = por %p138, %p139
      %s141 = ssub.s32 %s23, %s30
      %p142 = scmp.eq.s32.totalorder %s141, 0
      %s144 = sadd.s32 %s143, 1
      %s145 = scalar_select %p142, %s143, %s144
      %p148 = pneg %p142
      %p149 = scmp.eq.s32.totalorder %s23, 3
      %p150 = por %p148, %p149
      %p151 = scmp.ne.s32.totalorder %s143, %s146
      %p152 = scmp.eq.s32.totalorder %s23, 0
      %p153 = por %p151, %p152
      %p154 = scmp.ne.s32.totalorder %s143, %s146
      %p155 = scmp.eq.s32.totalorder %s28, 3
      %p156 = por %p154, %p155
      %p157 = scmp.ne.s32.totalorder %s146, %s147
      %p158 = scmp.eq.s32.totalorder %s28, 0
      %p159 = por %p157, %p158
      %p160 = scmp.ne.s32.totalorder %s146, %s147
      %p161 = scmp.eq.s32.totalorder %s29, 3
      %p162 = por %p160, %p161
      %p164 = scmp.ne.s32.totalorder %s147, %s163
      %p165 = scmp.eq.s32.totalorder %s29, 0
      %p166 = por %p164, %p165
      %s167 = ssub.s32 %s23, %s30
      %p168 = scmp.eq.s32.totalorder %s167, 0
      %s170 = sadd.s32 %s169, 1
      %s171 = scalar_select %p168, %s169, %s170
      %p174 = pneg %p168
      %p175 = scmp.eq.s32.totalorder %s23, 3
      %p176 = por %p174, %p175
      %p177 = scmp.ne.s32.totalorder %s169, %s172
      %p178 = scmp.eq.s32.totalorder %s23, 0
      %p179 = por %p177, %p178
      %p180 = scmp.ne.s32.totalorder %s169, %s172
      %p181 = scmp.eq.s32.totalorder %s28, 3
      %p182 = por %p180, %p181
      %p183 = scmp.ne.s32.totalorder %s172, %s173
      %p184 = scmp.eq.s32.totalorder %s28, 0
      %p185 = por %p183, %p184
      %p186 = scmp.ne.s32.totalorder %s172, %s173
      %p187 = scmp.eq.s32.totalorder %s29, 3
      %p188 = por %p186, %p187
      %p190 = scmp.ne.s32.totalorder %s173, %s189
      %p191 = scmp.eq.s32.totalorder %s29, 0
      %p192 = por %p190, %p191
      %p193 = scmp.le.s32.totalorder 1, %s23
      %p194 = scmp.lt.s32.totalorder %s23, 5
      %p195 = pnand %p193, %p194
      %p196 = pneg %p195
      // Predicated region
      $region9: #{tpu_custom_call.1} parent=5 // pred_check
        _
      $region10: #{tpu_custom_call.1} parent=5 // pred_check_branch
        %198 = sbr.rel (%p195) target = $region12
      $region11: #{tpu_custom_call.1} parent=5 // pred_region
        %s199 = ssub.s32 %s23, 1
        // Predicated region
        $region13: #{tpu_custom_call.1} parent=11 // pred_check
          %p200 = pneg %p70
        $region14: #{tpu_custom_call.1} parent=11 // pred_check_branch
          %202 = sbr.rel (%p200) target = $region16
        $region15: #{tpu_custom_call.1} parent=11 // pred_region
          %s204 = ssub.s32 4096, 4096
          %205 = vsyncadd [#allocation6], %s204
          %s206 = sshll.u32 [#allocation5], 4
          %s207 = int_to_ptr.vmem [resolvable:$true] %s206
          %212 = dma.hbm_to_vmem [thread:$0]  %s1, 4096, %s207, [#allocation6], 128, 128, 8
        $region16: #{tpu_custom_call.1} parent=11 // pred_fallthru
          _
        // Predicated region
        $region17: #{tpu_custom_call.1} parent=11 // pred_check
          %p213 = pneg %p91
        $region18: #{tpu_custom_call.1} parent=11 // pred_check_branch
          %215 = sbr.rel (%p213) target = $region20
        $region19: #{tpu_custom_call.1} parent=11 // pred_region
          _
        $region20: #{tpu_custom_call.1} parent=11 // pred_fallthru
          _
        // Predicated region
        $region21: #{tpu_custom_call.1} parent=11 // pred_check
          %p216 = pneg %p112
        $region22: #{tpu_custom_call.1} parent=11 // pred_check_branch
          %218 = sbr.rel (%p216) target = $region24
        $region23: #{tpu_custom_call.1} parent=11 // pred_region
          %s220 = ssub.s32 4096, 4096
          %221 = vsyncadd [#allocation6], %s220
          %s222 = sshll.u32 [#allocation7], 4
          %s223 = int_to_ptr.vmem [resolvable:$true] %s222
          %228 = dma.hbm_to_vmem [thread:$0]  %s3, 4096, %s223, [#allocation6], 256, 256, 16
        $region24: #{tpu_custom_call.1} parent=11 // pred_fallthru
          _
        // Predicated region
        $region25: #{tpu_custom_call.1} parent=11 // pred_check
          %p229 = pneg %p133
        $region26: #{tpu_custom_call.1} parent=11 // pred_check_branch
          %231 = sbr.rel (%p229) target = $region28
        $region27: #{tpu_custom_call.1} parent=11 // pred_region
          _
        $region28: #{tpu_custom_call.1} parent=11 // pred_fallthru
          _
      $region12: #{tpu_custom_call.1} parent=5 // pred_fallthru
        _
      %p232 = scmp.lt.s32.totalorder %s23, 4
      // Predicated region
      $region29: #{tpu_custom_call.1} parent=5 // pred_check
        %p233 = pneg %p232
      $region30: #{tpu_custom_call.1} parent=5 // pred_check_branch
        %235 = sbr.rel (%p233) target = $region32
      $region31: #{tpu_custom_call.1} parent=5 // pred_region
        // Predicated region
        $region33: #{tpu_custom_call.1} parent=31 // pred_check
          %p236 = pneg %p43
        $region34: #{tpu_custom_call.1} parent=31 // pred_check_branch
          %238 = sbr.rel (%p236) target = $region36
        $region35: #{tpu_custom_call.1} parent=31 // pred_region
          %s239 = sand.u32 %s33, 1
          %s240 = scalar_lea.sflag [#allocation3], %s239
          %s241 = sand.u32 %s33, 1
          %s242 = smul.addr %s241, 256
          %s243 = scalar_lea.vmem [#allocation2], %s242
          %s244 = smul.u32 16, %s23
          %s246 = ssub.s32 4096, 4096
          %247 = vsyncadd %s240, %s246
          %s248 = smul.addr %s244, 2
          %s249 = smul.addr %s248, 128
          %s250 = scalar_lea.hbm %s0, %s249
          %s251 = sshll.u32 %s243, 4
          %s252 = int_to_ptr.vmem [resolvable:$true] %s251
          %257 = dma.hbm_to_vmem [thread:$0]  %s250, 4096, %s252, %s240, 256, 256, 16
        $region36: #{tpu_custom_call.1} parent=31 // pred_fallthru
          _
      $region32: #{tpu_custom_call.1} parent=5 // pred_fallthru
        _
      %p258 = scmp.le.s32.totalorder 1, %s23
      %p259 = scmp.lt.s32.totalorder %s23, 5
      %p260 = pnand %p258, %p259
      %p261 = pneg %p260
      // Predicated region
      $region37: #{tpu_custom_call.1} parent=5 // pred_check
        _
      $region38: #{tpu_custom_call.1} parent=5 // pred_check_branch
        %263 = sbr.rel (%p260) target = $region40
      $region39: #{tpu_custom_call.1} parent=5 // pred_region
        %s264 = ssub.s32 %s23, 1
        %s265 = sand.u32 %s36, 1
        %s266 = scalar_lea.sflag [#allocation3], %s265
        %s267 = sand.u32 %s36, 1
        %s268 = smul.addr %s267, 256
        %s269 = scalar_lea.vmem [#allocation2], %s268
        // Predicated region
        $region41: #{tpu_custom_call.1} parent=39 // pred_check
          %p270 = pneg %p49
        $region42: #{tpu_custom_call.1} parent=39 // pred_check_branch
          %272 = sbr.rel (%p270) target = $region44
        $region43: #{tpu_custom_call.1} parent=39 // pred_region
          %273 = dma.done %s266, 4096
        $region44: #{tpu_custom_call.1} parent=39 // pred_fallthru
          _
        // Predicated region
        $region45: #{tpu_custom_call.1} parent=39 // pred_check
          %p274 = pneg %p70
        $region46: #{tpu_custom_call.1} parent=39 // pred_check_branch
          %276 = sbr.rel (%p274) target = $region48
        $region47: #{tpu_custom_call.1} parent=39 // pred_region
          %277 = dma.done [#allocation6], 4096
        $region48: #{tpu_custom_call.1} parent=39 // pred_fallthru
          _
        // Predicated region
        $region49: #{tpu_custom_call.1} parent=39 // pred_check
          %p278 = pneg %p112
        $region50: #{tpu_custom_call.1} parent=39 // pred_check_branch
          %280 = sbr.rel (%p278) target = $region52
        $region51: #{tpu_custom_call.1} parent=39 // pred_region
          %281 = dma.done [#allocation6], 4096
        $region52: #{tpu_custom_call.1} parent=39 // pred_fallthru
          _
        %s282 = sand.u32 %s36, 1
        %s283 = scalar_lea.sflag [#allocation3], %s282
        %s284 = sand.u32 %s36, 1
        %s285 = smul.addr %s284, 256
        %s286 = scalar_lea.vmem [#allocation2], %s285
        %p287 = pneg %p49
        %p288 = pneg %p46
        %p289 = pneg %p70
        %p290 = pneg %p67
        %p291 = pneg %p91
        %p292 = pneg %p88
        %p293 = pneg %p112
        %p294 = pneg %p109
        %p295 = pneg %p133
        %p296 = pneg %p130
        %p297 = pneg %p159
        %p298 = pneg %p156
        %s299 = sand.u32 %s146, 1
        %s300 = scalar_lea.sflag [#allocation4], %s299
        %s301 = sand.u32 %s146, 1
        %s302 = smul.addr %s301, 128
        %s303 = scalar_lea.vmem [#allocation8], %s302
        %p304 = pneg %p185
        %p305 = pneg %p182
        %s306 = sand.u32 %s172, 1
        %s307 = scalar_lea.sflag [#allocation10], %s306
        %s308 = sand.u32 %s172, 1
        %s309 = smul.addr %s308, 256
        %s310 = scalar_lea.vmem [#allocation9], %s309
        %s311 = smul.u32 16, %s28
        %s312 = smul.u32 16, %s28
        %s313 = smul.u32 16, %s28
        %v314 = vld [vmem:[%s269] sm:$0xff]
        %v315 = vld [vmem:[%s269 + $0x8] sm:$0xff]
        %v316 = vld [vmem:[%s269 + $0x10] sm:$0xff]
        %v317 = vld [vmem:[%s269 + $0x18] sm:$0xff]
        %v318 = vld [vmem:[%s269 + $0x20] sm:$0xff]
        %v319 = vld [vmem:[%s269 + $0x28] sm:$0xff]
        %v320 = vld [vmem:[%s269 + $0x30] sm:$0xff]
        %v321 = vld [vmem:[%s269 + $0x38] sm:$0xff]
        %v322 = vld [vmem:[%s269 + $0x40] sm:$0xff]
        %v323 = vld [vmem:[%s269 + $0x48] sm:$0xff]
        %v324 = vld [vmem:[%s269 + $0x50] sm:$0xff]
        %v325 = vld [vmem:[%s269 + $0x58] sm:$0xff]
        %v326 = vld [vmem:[%s269 + $0x60] sm:$0xff]
        %v327 = vld [vmem:[%s269 + $0x68] sm:$0xff]
        %v328 = vld [vmem:[%s269 + $0x70] sm:$0xff]
        %v329 = vld [vmem:[%s269 + $0x78] sm:$0xff]
        %v330 = vld [vmem:[%s269 + $0x80] sm:$0xff]
        %v331 = vld [vmem:[%s269 + $0x88] sm:$0xff]
        %v332 = vld [vmem:[%s269 + $0x90] sm:$0xff]
        %v333 = vld [vmem:[%s269 + $0x98] sm:$0xff]
        %v334 = vld [vmem:[%s269 + $0xa0] sm:$0xff]
        %v335 = vld [vmem:[%s269 + $0xa8] sm:$0xff]
        %v336 = vld [vmem:[%s269 + $0xb0] sm:$0xff]
        %v337 = vld [vmem:[%s269 + $0xb8] sm:$0xff]
        %v338 = vld [vmem:[%s269 + $0xc0] sm:$0xff]
        %v339 = vld [vmem:[%s269 + $0xc8] sm:$0xff]
        %v340 = vld [vmem:[%s269 + $0xd0] sm:$0xff]
        %v341 = vld [vmem:[%s269 + $0xd8] sm:$0xff]
        %v342 = vld [vmem:[%s269 + $0xe0] sm:$0xff]
        %v343 = vld [vmem:[%s269 + $0xe8] sm:$0xff]
        %v344 = vld [vmem:[%s269 + $0xf0] sm:$0xff]
        %v345 = vld [vmem:[%s269 + $0xf8] sm:$0xff]
        %v346 = vld [vmem:[#allocation5] sm:$0xff]
        %v347 = vld [vmem:[#allocation5 + $0x8] sm:$0xff]
        %v348 = vld [vmem:[#allocation5 + $0x10] sm:$0xff]
        %v349 = vld [vmem:[#allocation5 + $0x18] sm:$0xff]
        %v350 = vld [vmem:[#allocation5 + $0x20] sm:$0xff]
        %v351 = vld [vmem:[#allocation5 + $0x28] sm:$0xff]
        %v352 = vld [vmem:[#allocation5 + $0x30] sm:$0xff]
        %v353 = vld [vmem:[#allocation5 + $0x38] sm:$0xff]
        %v354 = vld [vmem:[#allocation5 + $0x40] sm:$0xff]
        %v355 = vld [vmem:[#allocation5 + $0x48] sm:$0xff]
        %v356 = vld [vmem:[#allocation5 + $0x50] sm:$0xff]
        %v357 = vld [vmem:[#allocation5 + $0x58] sm:$0xff]
        %v358 = vld [vmem:[#allocation5 + $0x60] sm:$0xff]
        %v359 = vld [vmem:[#allocation5 + $0x68] sm:$0xff]
        %v360 = vld [vmem:[#allocation5 + $0x70] sm:$0xff]
        %v361 = vld [vmem:[#allocation5 + $0x78] sm:$0xff]
        %v362 = vld [vmem:[#allocation5 + $0x80] sm:$0xff]
        %v363 = vld [vmem:[#allocation5 + $0x88] sm:$0xff]
        %v364 = vld [vmem:[#allocation5 + $0x90] sm:$0xff]
        %v365 = vld [vmem:[#allocation5 + $0x98] sm:$0xff]
        %v366 = vld [vmem:[#allocation5 + $0xa0] sm:$0xff]
        %v367 = vld [vmem:[#allocation5 + $0xa8] sm:$0xff]
        %v368 = vld [vmem:[#allocation5 + $0xb0] sm:$0xff]
        %v369 = vld [vmem:[#allocation5 + $0xb8] sm:$0xff]
        %v370 = vld [vmem:[#allocation5 + $0xc0] sm:$0xff]
        %v371 = vld [vmem:[#allocation5 + $0xc8] sm:$0xff]
        %v372 = vld [vmem:[#allocation5 + $0xd0] sm:$0xff]
        %v373 = vld [vmem:[#allocation5 + $0xd8] sm:$0xff]
        %v374 = vld [vmem:[#allocation5 + $0xe0] sm:$0xff]
        %v375 = vld [vmem:[#allocation5 + $0xe8] sm:$0xff]
        %v376 = vld [vmem:[#allocation5 + $0xf0] sm:$0xff]
        %v377 = vld [vmem:[#allocation5 + $0xf8] sm:$0xff]
        %v378 = vld [vmem:[%s2] sm:$0x1]
        %v380 = vlaneseq
        %v381 = vshrl.u32 %v380, 7
        %v382 = vsub.s32 0, %v381
        %v383 = vrot.slane %v378, %v382
        %385 = vmatprep.subr.mxu0 0.0
        %386 = vmatpush1.msra.mxu0 %v361
        %387 = vmatprep.subr.mxu0 0.0
        %388 = vmatpush1.msra.mxu0 %v360
        %389 = vmatprep.subr.mxu0 0.0
        %390 = vmatpush1.msra.mxu0 %v359
        %391 = vmatprep.subr.mxu0 0.0
        %392 = vmatpush1.msra.mxu0 %v358
        %393 = vmatprep.subr.mxu0 0.0
        %394 = vmatpush1.msra.mxu0 %v357
        %395 = vmatprep.subr.mxu0 0.0
        %396 = vmatpush1.msra.mxu0 %v356
        %397 = vmatprep.subr.mxu0 0.0
        %398 = vmatpush1.msra.mxu0 %v355
        %399 = vmatprep.subr.mxu0 0.0
        %400 = vmatpush1.msra.mxu0 %v354
        %401 = vmatprep.subr.mxu0 0.0
        %402 = vmatpush1.msra.mxu0 %v353
        %403 = vmatprep.subr.mxu0 0.0
        %404 = vmatpush1.msra.mxu0 %v352
        %405 = vmatprep.subr.mxu0 0.0
        %406 = vmatpush1.msra.mxu0 %v351
        %407 = vmatprep.subr.mxu0 0.0
        %408 = vmatpush1.msra.mxu0 %v350
        %409 = vmatprep.subr.mxu0 0.0
        %410 = vmatpush1.msra.mxu0 %v349
        %411 = vmatprep.subr.mxu0 0.0
        %412 = vmatpush1.msra.mxu0 %v348
        %413 = vmatprep.subr.mxu0 0.0
        %414 = vmatpush1.msra.mxu0 %v347
        %415 = vmatprep.subr.mxu0 0.0
        %416 = vmatpush1.msra.mxu0 %v346
        %417 = vmatprep.subr.mxu0 0.0
        %418 = vmatpush2.msra.mxu0 %v377
        %419 = vmatprep.subr.mxu0 0.0
        %420 = vmatpush2.msra.mxu0 %v376
        %421 = vmatprep.subr.mxu0 0.0
        %422 = vmatpush2.msra.mxu0 %v375
        %423 = vmatprep.subr.mxu0 0.0
        %424 = vmatpush2.msra.mxu0 %v374
        %425 = vmatprep.subr.mxu0 0.0
        %426 = vmatpush2.msra.mxu0 %v373
        %427 = vmatprep.subr.mxu0 0.0
        %428 = vmatpush2.msra.mxu0 %v372
        %429 = vmatprep.subr.mxu0 0.0
        %430 = vmatpush2.msra.mxu0 %v371
        %431 = vmatprep.subr.mxu0 0.0
        %432 = vmatpush2.msra.mxu0 %v370
        %433 = vmatprep.subr.mxu0 0.0
        %434 = vmatpush2.msra.mxu0 %v369
        %435 = vmatprep.subr.mxu0 0.0
        %436 = vmatpush2.msra.mxu0 %v368
        %437 = vmatprep.subr.mxu0 0.0
        %438 = vmatpush2.msra.mxu0 %v367
        %439 = vmatprep.subr.mxu0 0.0
        %440 = vmatpush2.msra.mxu0 %v366
        %441 = vmatprep.subr.mxu0 0.0
        %442 = vmatpush2.msra.mxu0 %v365
        %443 = vmatprep.subr.mxu0 0.0
        %444 = vmatpush2.msra.mxu0 %v364
        %445 = vmatprep.subr.mxu0 0.0
        %446 = vmatpush2.msra.mxu0 %v363
        %447 = vmatprep.subr.mxu0 0.0
        %448 = vmatpush2.msra.mxu0 %v362
        %449 = vmatprep.mubr.f32.mxu0 %v315
        %450 = vmatmul.mubr.f32.gmra.mxu0 %v314
        %v451 = vpop.f32.mrf.mxu0
        %v452 = vadd.f32 %v383, %v451
        %v453 = vpop.f32.mrf.mxu0
        %454 = vmatprep.mubr.f32.mxu0 %v317
        %455 = vmatmul.mubr.f32.gmra.mxu0 %v316
        %v456 = vpop.f32.mrf.mxu0
        %v457 = vadd.f32 %v383, %v456
        %v458 = vpop.f32.mrf.mxu0
        %459 = vmatprep.mubr.f32.mxu0 %v319
        %460 = vmatmul.mubr.f32.gmra.mxu0 %v318
        %v461 = vpop.f32.mrf.mxu0
        %v462 = vadd.f32 %v383, %v461
        %v463 = vpop.f32.mrf.mxu0
        %464 = vmatprep.mubr.f32.mxu0 %v321
        %465 = vmatmul.mubr.f32.gmra.mxu0 %v320
        %v466 = vpop.f32.mrf.mxu0
        %v467 = vadd.f32 %v383, %v466
        %v468 = vpop.f32.mrf.mxu0
        %469 = vmatprep.mubr.f32.mxu0 %v323
        %470 = vmatmul.mubr.f32.gmra.mxu0 %v322
        %v471 = vpop.f32.mrf.mxu0
        %v472 = vadd.f32 %v383, %v471
        %v473 = vpop.f32.mrf.mxu0
        %474 = vmatprep.mubr.f32.mxu0 %v325
        %475 = vmatmul.mubr.f32.gmra.mxu0 %v324
        %v476 = vpop.f32.mrf.mxu0
        %v477 = vadd.f32 %v383, %v476
        %v478 = vpop.f32.mrf.mxu0
        %479 = vmatprep.mubr.f32.mxu0 %v327
        %480 = vmatmul.mubr.f32.gmra.mxu0 %v326
        %v481 = vpop.f32.mrf.mxu0
        %v482 = vadd.f32 %v383, %v481
        %v483 = vpop.f32.mrf.mxu0
        %484 = vmatprep.mubr.f32.mxu0 %v329
        %485 = vmatmul.mubr.f32.gmra.mxu0 %v328
        %v486 = vpop.f32.mrf.mxu0
        %v487 = vadd.f32 %v383, %v486
        %v488 = vpop.f32.mrf.mxu0
        %489 = vmatprep.mubr.f32.mxu0 %v331
        %490 = vmatmul.mubr.f32.gmra.mxu0 %v330
        %v491 = vpop.f32.mrf.mxu0
        %v492 = vadd.f32 %v383, %v491
        %v493 = vpop.f32.mrf.mxu0
        %494 = vmatprep.mubr.f32.mxu0 %v333
        %495 = vmatmul.mubr.f32.gmra.mxu0 %v332
        %v496 = vpop.f32.mrf.mxu0
        %v497 = vadd.f32 %v383, %v496
        %v498 = vpop.f32.mrf.mxu0
        %499 = vmatprep.mubr.f32.mxu0 %v335
        %500 = vmatmul.mubr.f32.gmra.mxu0 %v334
        %v501 = vpop.f32.mrf.mxu0
        %v502 = vadd.f32 %v383, %v501
        %v503 = vpop.f32.mrf.mxu0
        %504 = vmatprep.mubr.f32.mxu0 %v337
        %505 = vmatmul.mubr.f32.gmra.mxu0 %v336
        %v506 = vpop.f32.mrf.mxu0
        %v507 = vadd.f32 %v383, %v506
        %v508 = vpop.f32.mrf.mxu0
        %509 = vmatprep.mubr.f32.mxu0 %v339
        %510 = vmatmul.mubr.f32.gmra.mxu0 %v338
        %v511 = vpop.f32.mrf.mxu0
        %v512 = vadd.f32 %v383, %v511
        %v513 = vpop.f32.mrf.mxu0
        %514 = vmatprep.mubr.f32.mxu0 %v341
        %515 = vmatmul.mubr.f32.gmra.mxu0 %v340
        %v516 = vpop.f32.mrf.mxu0
        %v517 = vadd.f32 %v383, %v516
        %v518 = vpop.f32.mrf.mxu0
        %519 = vmatprep.mubr.f32.mxu0 %v343
        %520 = vmatmul.mubr.f32.gmra.mxu0 %v342
        %v521 = vpop.f32.mrf.mxu0
        %v522 = vadd.f32 %v383, %v521
        %v523 = vpop.f32.mrf.mxu0
        %524 = vmatprep.mubr.f32.mxu0 %v345
        %525 = vmatmul.mubr.f32.gmra.mxu0 %v344
        %v526 = vpop.f32.mrf.mxu0
        %v527 = vadd.f32 %v383, %v526
        %v528 = vpop.f32.mrf.mxu0
        %529 = vdwg.mxu0
        %v530 = vsub.f32 0.0, %v452
        %v531 = vsub.f32 0.0, %v457
        %v532 = vsub.f32 0.0, %v462
        %v533 = vsub.f32 0.0, %v467
        %v534 = vsub.f32 0.0, %v472
        %v535 = vsub.f32 0.0, %v477
        %v536 = vsub.f32 0.0, %v482
        %v537 = vsub.f32 0.0, %v487
        %v538 = vsub.f32 0.0, %v492
        %v539 = vsub.f32 0.0, %v497
        %v540 = vsub.f32 0.0, %v502
        %v541 = vsub.f32 0.0, %v507
        %v542 = vsub.f32 0.0, %v512
        %v543 = vsub.f32 0.0, %v517
        %v544 = vsub.f32 0.0, %v522
        %v545 = vsub.f32 0.0, %v527
        %v546 = vmul.f32 %v530, 1.442695
        %v547 = vpow.pop %v546
        %v548 = vmul.f32 %v531, 1.442695
        %v549 = vpow.pop %v548
        %v550 = vmul.f32 %v532, 1.442695
        %v551 = vpow.pop %v550
        %v552 = vmul.f32 %v533, 1.442695
        %v553 = vpow.pop %v552
        %v554 = vmul.f32 %v534, 1.442695
        %v555 = vpow.pop %v554
        %v556 = vmul.f32 %v535, 1.442695
        %v557 = vpow.pop %v556
        %v558 = vmul.f32 %v536, 1.442695
        %v559 = vpow.pop %v558
        %v560 = vmul.f32 %v537, 1.442695
        %v561 = vpow.pop %v560
        %v562 = vmul.f32 %v538, 1.442695
        %v563 = vpow.pop %v562
        %v564 = vmul.f32 %v539, 1.442695
        %v565 = vpow.pop %v564
        %v566 = vmul.f32 %v540, 1.442695
        %v567 = vpow.pop %v566
        %v568 = vmul.f32 %v541, 1.442695
        %v569 = vpow.pop %v568
        %v570 = vmul.f32 %v542, 1.442695
        %v571 = vpow.pop %v570
        %v572 = vmul.f32 %v543, 1.442695
        %v573 = vpow.pop %v572
        %v574 = vmul.f32 %v544, 1.442695
        %v575 = vpow.pop %v574
        %v576 = vmul.f32 %v545, 1.442695
        %v577 = vpow.pop %v576
        %v578 = vadd.f32 %v547, 1.0
        %v579 = vadd.f32 %v549, 1.0
        %v580 = vadd.f32 %v551, 1.0
        %v581 = vadd.f32 %v553, 1.0
        %v582 = vadd.f32 %v555, 1.0
        %v583 = vadd.f32 %v557, 1.0
        %v584 = vadd.f32 %v559, 1.0
        %v585 = vadd.f32 %v561, 1.0
        %v586 = vadd.f32 %v563, 1.0
        %v587 = vadd.f32 %v565, 1.0
        %v588 = vadd.f32 %v567, 1.0
        %v589 = vadd.f32 %v569, 1.0
        %v590 = vadd.f32 %v571, 1.0
        %v591 = vadd.f32 %v573, 1.0
        %v592 = vadd.f32 %v575, 1.0
        %v593 = vadd.f32 %v577, 1.0
        %v594 = vrcp.pop %v578
        %v595 = vmul.f32 1.0, %v594
        %v596 = vrcp.pop %v579
        %v597 = vmul.f32 1.0, %v596
        %v598 = vrcp.pop %v580
        %v599 = vmul.f32 1.0, %v598
        %v600 = vrcp.pop %v581
        %v601 = vmul.f32 1.0, %v600
        %v602 = vrcp.pop %v582
        %v603 = vmul.f32 1.0, %v602
        %v604 = vrcp.pop %v583
        %v605 = vmul.f32 1.0, %v604
        %v606 = vrcp.pop %v584
        %v607 = vmul.f32 1.0, %v606
        %v608 = vrcp.pop %v585
        %v609 = vmul.f32 1.0, %v608
        %v610 = vrcp.pop %v586
        %v611 = vmul.f32 1.0, %v610
        %v612 = vrcp.pop %v587
        %v613 = vmul.f32 1.0, %v612
        %v614 = vrcp.pop %v588
        %v615 = vmul.f32 1.0, %v614
        %v616 = vrcp.pop %v589
        %v617 = vmul.f32 1.0, %v616
        %v618 = vrcp.pop %v590
        %v619 = vmul.f32 1.0, %v618
        %v620 = vrcp.pop %v591
        %v621 = vmul.f32 1.0, %v620
        %v622 = vrcp.pop %v592
        %v623 = vmul.f32 1.0, %v622
        %v624 = vrcp.pop %v593
        %v625 = vmul.f32 1.0, %v624
        %626 = vst [vmem:[%s303] sm:$0xff] %v595
        %627 = vst [vmem:[%s303 + $0x8] sm:$0xff] %v597
        %628 = vst [vmem:[%s303 + $0x10] sm:$0xff] %v599
        %629 = vst [vmem:[%s303 + $0x18] sm:$0xff] %v601
        %630 = vst [vmem:[%s303 + $0x20] sm:$0xff] %v603
        %631 = vst [vmem:[%s303 + $0x28] sm:$0xff] %v605
        %632 = vst [vmem:[%s303 + $0x30] sm:$0xff] %v607
        %633 = vst [vmem:[%s303 + $0x38] sm:$0xff] %v609
        %634 = vst [vmem:[%s303 + $0x40] sm:$0xff] %v611
        %635 = vst [vmem:[%s303 + $0x48] sm:$0xff] %v613
        %636 = vst [vmem:[%s303 + $0x50] sm:$0xff] %v615
        %637 = vst [vmem:[%s303 + $0x58] sm:$0xff] %v617
        %638 = vst [vmem:[%s303 + $0x60] sm:$0xff] %v619
        %639 = vst [vmem:[%s303 + $0x68] sm:$0xff] %v621
        %640 = vst [vmem:[%s303 + $0x70] sm:$0xff] %v623
        %641 = vst [vmem:[%s303 + $0x78] sm:$0xff] %v625
        %v642 = vld [vmem:[#allocation7] sm:$0xff]
        %v643 = vld [vmem:[#allocation7 + $0x8] sm:$0xff]
        %v644 = vld [vmem:[#allocation7 + $0x10] sm:$0xff]
        %v645 = vld [vmem:[#allocation7 + $0x18] sm:$0xff]
        %v646 = vld [vmem:[#allocation7 + $0x20] sm:$0xff]
        %v647 = vld [vmem:[#allocation7 + $0x28] sm:$0xff]
        %v648 = vld [vmem:[#allocation7 + $0x30] sm:$0xff]
        %v649 = vld [vmem:[#allocation7 + $0x38] sm:$0xff]
        %v650 = vld [vmem:[#allocation7 + $0x40] sm:$0xff]
        %v651 = vld [vmem:[#allocation7 + $0x48] sm:$0xff]
        %v652 = vld [vmem:[#allocation7 + $0x50] sm:$0xff]
        %v653 = vld [vmem:[#allocation7 + $0x58] sm:$0xff]
        %v654 = vld [vmem:[#allocation7 + $0x60] sm:$0xff]
        %v655 = vld [vmem:[#allocation7 + $0x68] sm:$0xff]
        %v656 = vld [vmem:[#allocation7 + $0x70] sm:$0xff]
        %v657 = vld [vmem:[#allocation7 + $0x78] sm:$0xff]
        %v658 = vld [vmem:[#allocation7 + $0x80] sm:$0xff]
        %v659 = vld [vmem:[#allocation7 + $0x88] sm:$0xff]
        %v660 = vld [vmem:[#allocation7 + $0x90] sm:$0xff]
        %v661 = vld [vmem:[#allocation7 + $0x98] sm:$0xff]
        %v662 = vld [vmem:[#allocation7 + $0xa0] sm:$0xff]
        %v663 = vld [vmem:[#allocation7 + $0xa8] sm:$0xff]
        %v664 = vld [vmem:[#allocation7 + $0xb0] sm:$0xff]
        %v665 = vld [vmem:[#allocation7 + $0xb8] sm:$0xff]
        %v666 = vld [vmem:[#allocation7 + $0xc0] sm:$0xff]
        %v667 = vld [vmem:[#allocation7 + $0xc8] sm:$0xff]
        %v668 = vld [vmem:[#allocation7 + $0xd0] sm:$0xff]
        %v669 = vld [vmem:[#allocation7 + $0xd8] sm:$0xff]
        %v670 = vld [vmem:[#allocation7 + $0xe0] sm:$0xff]
        %v671 = vld [vmem:[#allocation7 + $0xe8] sm:$0xff]
        %v672 = vld [vmem:[#allocation7 + $0xf0] sm:$0xff]
        %v673 = vld [vmem:[#allocation7 + $0xf8] sm:$0xff]
        %v674 = vld [vmem:[%s4] sm:$0x3]
        %v676 = vlaneseq
        %v677 = vshrl.u32 %v676, 7
        %v678 = vsub.s32 0, %v677
        %v679 = vrot.slane %v674, %v678
        %v680 = vlaneseq
        %v681 = vshrl.u32 %v680, 7
        %v682 = vsub.s32 1, %v681
        %v683 = vrot.slane %v674, %v682
        %686 = vmatprep.subr.mxu0 %v673
        %687 = vmatpush1.msra.mxu0 %v672
        %688 = vmatprep.subr.mxu0 %v671
        %689 = vmatpush1.msra.mxu0 %v670
        %690 = vmatprep.subr.mxu0 %v669
        %691 = vmatpush1.msra.mxu0 %v668
        %692 = vmatprep.subr.mxu0 %v667
        %693 = vmatpush1.msra.mxu0 %v666
        %694 = vmatprep.subr.mxu0 %v665
        %695 = vmatpush1.msra.mxu0 %v664
        %696 = vmatprep.subr.mxu0 %v663
        %697 = vmatpush1.msra.mxu0 %v662
        %698 = vmatprep.subr.mxu0 %v661
        %699 = vmatpush1.msra.mxu0 %v660
        %700 = vmatprep.subr.mxu0 %v659
        %701 = vmatpush1.msra.mxu0 %v658
        %702 = vmatprep.subr.mxu0 %v657
        %703 = vmatpush1.msra.mxu0 %v656
        %704 = vmatprep.subr.mxu0 %v655
        %705 = vmatpush1.msra.mxu0 %v654
        %706 = vmatprep.subr.mxu0 %v653
        %707 = vmatpush1.msra.mxu0 %v652
        %708 = vmatprep.subr.mxu0 %v651
        %709 = vmatpush1.msra.mxu0 %v650
        %710 = vmatprep.subr.mxu0 %v649
        %711 = vmatpush1.msra.mxu0 %v648
        %712 = vmatprep.subr.mxu0 %v647
        %713 = vmatpush1.msra.mxu0 %v646
        %714 = vmatprep.subr.mxu0 %v645
        %715 = vmatpush1.msra.mxu0 %v644
        %716 = vmatprep.subr.mxu0 %v643
        %717 = vmatpush1.msra.mxu0 %v642
        %718 = vmatprep.subr.mxu0 0.0
        %719 = vmatpush2.msra.mxu0 0.0
        %720 = vmatprep.subr.mxu0 0.0
        %721 = vmatpush2.msra.mxu0 0.0
        %722 = vmatprep.subr.mxu0 0.0
        %723 = vmatpush2.msra.mxu0 0.0
        %724 = vmatprep.subr.mxu0 0.0
        %725 = vmatpush2.msra.mxu0 0.0
        %726 = vmatprep.subr.mxu0 0.0
        %727 = vmatpush2.msra.mxu0 0.0
        %728 = vmatprep.subr.mxu0 0.0
        %729 = vmatpush2.msra.mxu0 0.0
        %730 = vmatprep.subr.mxu0 0.0
        %731 = vmatpush2.msra.mxu0 0.0
        %732 = vmatprep.subr.mxu0 0.0
        %733 = vmatpush2.msra.mxu0 0.0
        %734 = vmatprep.subr.mxu0 0.0
        %735 = vmatpush2.msra.mxu0 0.0
        %736 = vmatprep.subr.mxu0 0.0
        %737 = vmatpush2.msra.mxu0 0.0
        %738 = vmatprep.subr.mxu0 0.0
        %739 = vmatpush2.msra.mxu0 0.0
        %740 = vmatprep.subr.mxu0 0.0
        %741 = vmatpush2.msra.mxu0 0.0
        %742 = vmatprep.subr.mxu0 0.0
        %743 = vmatpush2.msra.mxu0 0.0
        %744 = vmatprep.subr.mxu0 0.0
        %745 = vmatpush2.msra.mxu0 0.0
        %746 = vmatprep.subr.mxu0 0.0
        %747 = vmatpush2.msra.mxu0 0.0
        %748 = vmatprep.subr.mxu0 0.0
        %749 = vmatpush2.msra.mxu0 0.0
        %750 = vmatprep.mubr.f32.mxu0 0.0
        %751 = vmatmul.mubr.f32.gmra.mxu0 %v595
        %v752 = vpop.f32.mrf.mxu0
        %v753 = vadd.f32 %v679, %v752
        %v754 = vpop.f32.mrf.mxu0
        %v755 = vadd.f32 %v683, %v754
        %756 = vmatprep.mubr.f32.mxu0 0.0
        %757 = vmatmul.mubr.f32.gmra.mxu0 %v597
        %v758 = vpop.f32.mrf.mxu0
        %v759 = vadd.f32 %v679, %v758
        %v760 = vpop.f32.mrf.mxu0
        %v761 = vadd.f32 %v683, %v760
        %762 = vmatprep.mubr.f32.mxu0 0.0
        %763 = vmatmul.mubr.f32.gmra.mxu0 %v599
        %v764 = vpop.f32.mrf.mxu0
        %v765 = vadd.f32 %v679, %v764
        %v766 = vpop.f32.mrf.mxu0
        %v767 = vadd.f32 %v683, %v766
        %768 = vmatprep.mubr.f32.mxu0 0.0
        %769 = vmatmul.mubr.f32.gmra.mxu0 %v601
        %v770 = vpop.f32.mrf.mxu0
        %v771 = vadd.f32 %v679, %v770
        %v772 = vpop.f32.mrf.mxu0
        %v773 = vadd.f32 %v683, %v772
        %774 = vmatprep.mubr.f32.mxu0 0.0
        %775 = vmatmul.mubr.f32.gmra.mxu0 %v603
        %v776 = vpop.f32.mrf.mxu0
        %v777 = vadd.f32 %v679, %v776
        %v778 = vpop.f32.mrf.mxu0
        %v779 = vadd.f32 %v683, %v778
        %780 = vmatprep.mubr.f32.mxu0 0.0
        %781 = vmatmul.mubr.f32.gmra.mxu0 %v605
        %v782 = vpop.f32.mrf.mxu0
        %v783 = vadd.f32 %v679, %v782
        %v784 = vpop.f32.mrf.mxu0
        %v785 = vadd.f32 %v683, %v784
        %786 = vmatprep.mubr.f32.mxu0 0.0
        %787 = vmatmul.mubr.f32.gmra.mxu0 %v607
        %v788 = vpop.f32.mrf.mxu0
        %v789 = vadd.f32 %v679, %v788
        %v790 = vpop.f32.mrf.mxu0
        %v791 = vadd.f32 %v683, %v790
        %792 = vmatprep.mubr.f32.mxu0 0.0
        %793 = vmatmul.mubr.f32.gmra.mxu0 %v609
        %v794 = vpop.f32.mrf.mxu0
        %v795 = vadd.f32 %v679, %v794
        %v796 = vpop.f32.mrf.mxu0
        %v797 = vadd.f32 %v683, %v796
        %798 = vmatprep.mubr.f32.mxu0 0.0
        %799 = vmatmul.mubr.f32.gmra.mxu0 %v611
        %v800 = vpop.f32.mrf.mxu0
        %v801 = vadd.f32 %v679, %v800
        %v802 = vpop.f32.mrf.mxu0
        %v803 = vadd.f32 %v683, %v802
        %804 = vmatprep.mubr.f32.mxu0 0.0
        %805 = vmatmul.mubr.f32.gmra.mxu0 %v613
        %v806 = vpop.f32.mrf.mxu0
        %v807 = vadd.f32 %v679, %v806
        %v808 = vpop.f32.mrf.mxu0
        %v809 = vadd.f32 %v683, %v808
        %810 = vmatprep.mubr.f32.mxu0 0.0
        %811 = vmatmul.mubr.f32.gmra.mxu0 %v615
        %v812 = vpop.f32.mrf.mxu0
        %v813 = vadd.f32 %v679, %v812
        %v814 = vpop.f32.mrf.mxu0
        %v815 = vadd.f32 %v683, %v814
        %816 = vmatprep.mubr.f32.mxu0 0.0
        %817 = vmatmul.mubr.f32.gmra.mxu0 %v617
        %v818 = vpop.f32.mrf.mxu0
        %v819 = vadd.f32 %v679, %v818
        %v820 = vpop.f32.mrf.mxu0
        %v821 = vadd.f32 %v683, %v820
        %822 = vmatprep.mubr.f32.mxu0 0.0
        %823 = vmatmul.mubr.f32.gmra.mxu0 %v619
        %v824 = vpop.f32.mrf.mxu0
        %v825 = vadd.f32 %v679, %v824
        %v826 = vpop.f32.mrf.mxu0
        %v827 = vadd.f32 %v683, %v826
        %828 = vmatprep.mubr.f32.mxu0 0.0
        %829 = vmatmul.mubr.f32.gmra.mxu0 %v621
        %v830 = vpop.f32.mrf.mxu0
        %v831 = vadd.f32 %v679, %v830
        %v832 = vpop.f32.mrf.mxu0
        %v833 = vadd.f32 %v683, %v832
        %834 = vmatprep.mubr.f32.mxu0 0.0
        %835 = vmatmul.mubr.f32.gmra.mxu0 %v623
        %v836 = vpop.f32.mrf.mxu0
        %v837 = vadd.f32 %v679, %v836
        %v838 = vpop.f32.mrf.mxu0
        %v839 = vadd.f32 %v683, %v838
        %840 = vmatprep.mubr.f32.mxu0 0.0
        %841 = vmatmul.mubr.f32.gmra.mxu0 %v625
        %v842 = vpop.f32.mrf.mxu0
        %v843 = vadd.f32 %v679, %v842
        %v844 = vpop.f32.mrf.mxu0
        %v845 = vadd.f32 %v683, %v844
        %846 = vdwg.mxu0
        %v847 = vsub.f32 0.0, %v753
        %v848 = vsub.f32 0.0, %v755
        %v849 = vsub.f32 0.0, %v759
        %v850 = vsub.f32 0.0, %v761
        %v851 = vsub.f32 0.0, %v765
        %v852 = vsub.f32 0.0, %v767
        %v853 = vsub.f32 0.0, %v771
        %v854 = vsub.f32 0.0, %v773
        %v855 = vsub.f32 0.0, %v777
        %v856 = vsub.f32 0.0, %v779
        %v857 = vsub.f32 0.0, %v783
        %v858 = vsub.f32 0.0, %v785
        %v859 = vsub.f32 0.0, %v789
        %v860 = vsub.f32 0.0, %v791
        %v861 = vsub.f32 0.0, %v795
        %v862 = vsub.f32 0.0, %v797
        %v863 = vsub.f32 0.0, %v801
        %v864 = vsub.f32 0.0, %v803
        %v865 = vsub.f32 0.0, %v807
        %v866 = vsub.f32 0.0, %v809
        %v867 = vsub.f32 0.0, %v813
        %v868 = vsub.f32 0.0, %v815
        %v869 = vsub.f32 0.0, %v819
        %v870 = vsub.f32 0.0, %v821
        %v871 = vsub.f32 0.0, %v825
        %v872 = vsub.f32 0.0, %v827
        %v873 = vsub.f32 0.0, %v831
        %v874 = vsub.f32 0.0, %v833
        %v875 = vsub.f32 0.0, %v837
        %v876 = vsub.f32 0.0, %v839
        %v877 = vsub.f32 0.0, %v843
        %v878 = vsub.f32 0.0, %v845
        %v879 = vmul.f32 %v847, 1.442695
        %v880 = vpow.pop %v879
        %v881 = vmul.f32 %v848, 1.442695
        %v882 = vpow.pop %v881
        %v883 = vmul.f32 %v849, 1.442695
        %v884 = vpow.pop %v883
        %v885 = vmul.f32 %v850, 1.442695
        %v886 = vpow.pop %v885
        %v887 = vmul.f32 %v851, 1.442695
        %v888 = vpow.pop %v887
        %v889 = vmul.f32 %v852, 1.442695
        %v890 = vpow.pop %v889
        %v891 = vmul.f32 %v853, 1.442695
        %v892 = vpow.pop %v891
        %v893 = vmul.f32 %v854, 1.442695
        %v894 = vpow.pop %v893
        %v895 = vmul.f32 %v855, 1.442695
        %v896 = vpow.pop %v895
        %v897 = vmul.f32 %v856, 1.442695
        %v898 = vpow.pop %v897
        %v899 = vmul.f32 %v857, 1.442695
        %v900 = vpow.pop %v899
        %v901 = vmul.f32 %v858, 1.442695
        %v902 = vpow.pop %v901
        %v903 = vmul.f32 %v859, 1.442695
        %v904 = vpow.pop %v903
        %v905 = vmul.f32 %v860, 1.442695
        %v906 = vpow.pop %v905
        %v907 = vmul.f32 %v861, 1.442695
        %v908 = vpow.pop %v907
        %v909 = vmul.f32 %v862, 1.442695
        %v910 = vpow.pop %v909
        %v911 = vmul.f32 %v863, 1.442695
        %v912 = vpow.pop %v911
        %v913 = vmul.f32 %v864, 1.442695
        %v914 = vpow.pop %v913
        %v915 = vmul.f32 %v865, 1.442695
        %v916 = vpow.pop %v915
        %v917 = vmul.f32 %v866, 1.442695
        %v918 = vpow.pop %v917
        %v919 = vmul.f32 %v867, 1.442695
        %v920 = vpow.pop %v919
        %v921 = vmul.f32 %v868, 1.442695
        %v922 = vpow.pop %v921
        %v923 = vmul.f32 %v869, 1.442695
        %v924 = vpow.pop %v923
        %v925 = vmul.f32 %v870, 1.442695
        %v926 = vpow.pop %v925
        %v927 = vmul.f32 %v871, 1.442695
        %v928 = vpow.pop %v927
        %v929 = vmul.f32 %v872, 1.442695
        %v930 = vpow.pop %v929
        %v931 = vmul.f32 %v873, 1.442695
        %v932 = vpow.pop %v931
        %v933 = vmul.f32 %v874, 1.442695
        %v934 = vpow.pop %v933
        %v935 = vmul.f32 %v875, 1.442695
        %v936 = vpow.pop %v935
        %v937 = vmul.f32 %v876, 1.442695
        %v938 = vpow.pop %v937
        %v939 = vmul.f32 %v877, 1.442695
        %v940 = vpow.pop %v939
        %v941 = vmul.f32 %v878, 1.442695
        %v942 = vpow.pop %v941
        %v943 = vadd.f32 %v880, 1.0
        %v944 = vadd.f32 %v882, 1.0
        %v945 = vadd.f32 %v884, 1.0
        %v946 = vadd.f32 %v886, 1.0
        %v947 = vadd.f32 %v888, 1.0
        %v948 = vadd.f32 %v890, 1.0
        %v949 = vadd.f32 %v892, 1.0
        %v950 = vadd.f32 %v894, 1.0
        %v951 = vadd.f32 %v896, 1.0
        %v952 = vadd.f32 %v898, 1.0
        %v953 = vadd.f32 %v900, 1.0
        %v954 = vadd.f32 %v902, 1.0
        %v955 = vadd.f32 %v904, 1.0
        %v956 = vadd.f32 %v906, 1.0
        %v957 = vadd.f32 %v908, 1.0
        %v958 = vadd.f32 %v910, 1.0
        %v959 = vadd.f32 %v912, 1.0
        %v960 = vadd.f32 %v914, 1.0
        %v961 = vadd.f32 %v916, 1.0
        %v962 = vadd.f32 %v918, 1.0
        %v963 = vadd.f32 %v920, 1.0
        %v964 = vadd.f32 %v922, 1.0
        %v965 = vadd.f32 %v924, 1.0
        %v966 = vadd.f32 %v926, 1.0
        %v967 = vadd.f32 %v928, 1.0
        %v968 = vadd.f32 %v930, 1.0
        %v969 = vadd.f32 %v932, 1.0
        %v970 = vadd.f32 %v934, 1.0
        %v971 = vadd.f32 %v936, 1.0
        %v972 = vadd.f32 %v938, 1.0
        %v973 = vadd.f32 %v940, 1.0
        %v974 = vadd.f32 %v942, 1.0
        %v975 = vrcp.pop %v943
        %v976 = vmul.f32 1.0, %v975
        %v977 = vrcp.pop %v944
        %v978 = vmul.f32 1.0, %v977
        %v979 = vrcp.pop %v945
        %v980 = vmul.f32 1.0, %v979
        %v981 = vrcp.pop %v946
        %v982 = vmul.f32 1.0, %v981
        %v983 = vrcp.pop %v947
        %v984 = vmul.f32 1.0, %v983
        %v985 = vrcp.pop %v948
        %v986 = vmul.f32 1.0, %v985
        %v987 = vrcp.pop %v949
        %v988 = vmul.f32 1.0, %v987
        %v989 = vrcp.pop %v950
        %v990 = vmul.f32 1.0, %v989
        %v991 = vrcp.pop %v951
        %v992 = vmul.f32 1.0, %v991
        %v993 = vrcp.pop %v952
        %v994 = vmul.f32 1.0, %v993
        %v995 = vrcp.pop %v953
        %v996 = vmul.f32 1.0, %v995
        %v997 = vrcp.pop %v954
        %v998 = vmul.f32 1.0, %v997
        %v999 = vrcp.pop %v955
        %v1000 = vmul.f32 1.0, %v999
        %v1001 = vrcp.pop %v956
        %v1002 = vmul.f32 1.0, %v1001
        %v1003 = vrcp.pop %v957
        %v1004 = vmul.f32 1.0, %v1003
        %v1005 = vrcp.pop %v958
        %v1006 = vmul.f32 1.0, %v1005
        %v1007 = vrcp.pop %v959
        %v1008 = vmul.f32 1.0, %v1007
        %v1009 = vrcp.pop %v960
        %v1010 = vmul.f32 1.0, %v1009
        %v1011 = vrcp.pop %v961
        %v1012 = vmul.f32 1.0, %v1011
        %v1013 = vrcp.pop %v962
        %v1014 = vmul.f32 1.0, %v1013
        %v1015 = vrcp.pop %v963
        %v1016 = vmul.f32 1.0, %v1015
        %v1017 = vrcp.pop %v964
        %v1018 = vmul.f32 1.0, %v1017
        %v1019 = vrcp.pop %v965
        %v1020 = vmul.f32 1.0, %v1019
        %v1021 = vrcp.pop %v966
        %v1022 = vmul.f32 1.0, %v1021
        %v1023 = vrcp.pop %v967
        %v1024 = vmul.f32 1.0, %v1023
        %v1025 = vrcp.pop %v968
        %v1026 = vmul.f32 1.0, %v1025
        %v1027 = vrcp.pop %v969
        %v1028 = vmul.f32 1.0, %v1027
        %v1029 = vrcp.pop %v970
        %v1030 = vmul.f32 1.0, %v1029
        %v1031 = vrcp.pop %v971
        %v1032 = vmul.f32 1.0, %v1031
        %v1033 = vrcp.pop %v972
        %v1034 = vmul.f32 1.0, %v1033
        %v1035 = vrcp.pop %v973
        %v1036 = vmul.f32 1.0, %v1035
        %v1037 = vrcp.pop %v974
        %v1038 = vmul.f32 1.0, %v1037
        %1039 = vst [vmem:[%s310] sm:$0xff] %v976
        %1040 = vst [vmem:[%s310 + $0x8] sm:$0xff] %v978
        %1041 = vst [vmem:[%s310 + $0x10] sm:$0xff] %v980
        %1042 = vst [vmem:[%s310 + $0x18] sm:$0xff] %v982
        %1043 = vst [vmem:[%s310 + $0x20] sm:$0xff] %v984
        %1044 = vst [vmem:[%s310 + $0x28] sm:$0xff] %v986
        %1045 = vst [vmem:[%s310 + $0x30] sm:$0xff] %v988
        %1046 = vst [vmem:[%s310 + $0x38] sm:$0xff] %v990
        %1047 = vst [vmem:[%s310 + $0x40] sm:$0xff] %v992
        %1048 = vst [vmem:[%s310 + $0x48] sm:$0xff] %v994
        %1049 = vst [vmem:[%s310 + $0x50] sm:$0xff] %v996
        %1050 = vst [vmem:[%s310 + $0x58] sm:$0xff] %v998
        %1051 = vst [vmem:[%s310 + $0x60] sm:$0xff] %v1000
        %1052 = vst [vmem:[%s310 + $0x68] sm:$0xff] %v1002
        %1053 = vst [vmem:[%s310 + $0x70] sm:$0xff] %v1004
        %1054 = vst [vmem:[%s310 + $0x78] sm:$0xff] %v1006
        %1055 = vst [vmem:[%s310 + $0x80] sm:$0xff] %v1008
        %1056 = vst [vmem:[%s310 + $0x88] sm:$0xff] %v1010
        %1057 = vst [vmem:[%s310 + $0x90] sm:$0xff] %v1012
        %1058 = vst [vmem:[%s310 + $0x98] sm:$0xff] %v1014
        %1059 = vst [vmem:[%s310 + $0xa0] sm:$0xff] %v1016
        %1060 = vst [vmem:[%s310 + $0xa8] sm:$0xff] %v1018
        %1061 = vst [vmem:[%s310 + $0xb0] sm:$0xff] %v1020
        %1062 = vst [vmem:[%s310 + $0xb8] sm:$0xff] %v1022
        %1063 = vst [vmem:[%s310 + $0xc0] sm:$0xff] %v1024
        %1064 = vst [vmem:[%s310 + $0xc8] sm:$0xff] %v1026
        %1065 = vst [vmem:[%s310 + $0xd0] sm:$0xff] %v1028
        %1066 = vst [vmem:[%s310 + $0xd8] sm:$0xff] %v1030
        %1067 = vst [vmem:[%s310 + $0xe0] sm:$0xff] %v1032
        %1068 = vst [vmem:[%s310 + $0xe8] sm:$0xff] %v1034
        %1069 = vst [vmem:[%s310 + $0xf0] sm:$0xff] %v1036
        %1070 = vst [vmem:[%s310 + $0xf8] sm:$0xff] %v1038
        %s1071 = sand.u32 %s146, 1
        %s1072 = scalar_lea.sflag [#allocation4], %s1071
        %s1073 = sand.u32 %s146, 1
        %s1074 = smul.addr %s1073, 128
        %s1075 = scalar_lea.vmem [#allocation8], %s1074
        %s1076 = sand.u32 %s172, 1
        %s1077 = scalar_lea.sflag [#allocation10], %s1076
        %s1078 = sand.u32 %s172, 1
        %s1079 = smul.addr %s1078, 256
        %s1080 = scalar_lea.vmem [#allocation9], %s1079
        // Predicated region
        $region53: #{tpu_custom_call.1} parent=39 // pred_check
          %p1081 = pneg %p156
        $region54: #{tpu_custom_call.1} parent=39 // pred_check_branch
          %1083 = sbr.rel (%p1081) target = $region56
        $region55: #{tpu_custom_call.1} parent=39 // pred_region
          %s1084 = smul.u32 16, %s28
          %s1086 = ssub.s32 2048, 2048
          %1087 = vsyncadd %s1072, %s1086
          %s1088 = smul.addr %s1084, 128
          %s1089 = scalar_lea.hbm %s5, %s1088
          %s1090 = sshll.u32 %s1075, 4
          %s1091 = int_to_ptr.vmem [resolvable:$true] %s1090
          %1096 = dma.vmem_to_hbm [thread:$0]  %s1091, 2048, %s1089, %s1072, 128, 128, 8
        $region56: #{tpu_custom_call.1} parent=39 // pred_fallthru
          _
        // Predicated region
        $region57: #{tpu_custom_call.1} parent=39 // pred_check
          %p1097 = pneg %p182
        $region58: #{tpu_custom_call.1} parent=39 // pred_check_branch
          %1099 = sbr.rel (%p1097) target = $region60
        $region59: #{tpu_custom_call.1} parent=39 // pred_region
          %s1100 = smul.u32 16, %s28
          %s1102 = ssub.s32 4096, 4096
          %1103 = vsyncadd %s1077, %s1102
          %s1104 = smul.addr %s1100, 2
          %s1105 = smul.addr %s1104, 128
          %s1106 = scalar_lea.hbm %s6, %s1105
          %s1107 = sshll.u32 %s1080, 4
          %s1108 = int_to_ptr.vmem [resolvable:$true] %s1107
          %1113 = dma.vmem_to_hbm [thread:$0]  %s1108, 4096, %s1106, %s1077, 256, 256, 16
        $region60: #{tpu_custom_call.1} parent=39 // pred_fallthru
          _
      $region40: #{tpu_custom_call.1} parent=5 // pred_fallthru
        _
      %p1114 = scmp.le.s32.totalorder 2, %s23
      // Predicated region
      $region61: #{tpu_custom_call.1} parent=5 // pred_check
        %p1115 = pneg %p1114
      $region62: #{tpu_custom_call.1} parent=5 // pred_check_branch
        %1117 = sbr.rel (%p1115) target = $region64
      $region63: #{tpu_custom_call.1} parent=5 // pred_region
        %s1118 = ssub.s32 %s23, 2
        // Predicated region
        $region65: #{tpu_custom_call.1} parent=63 // pred_check
          %p1119 = pneg %p162
        $region66: #{tpu_custom_call.1} parent=63 // pred_check_branch
          %1121 = sbr.rel (%p1119) target = $region68
        $region67: #{tpu_custom_call.1} parent=63 // pred_region
          %s1122 = sand.u32 %s147, 1
          %s1123 = scalar_lea.sflag [#allocation4], %s1122
          %s1124 = sand.u32 %s147, 1
          %s1125 = smul.addr %s1124, 128
          %s1126 = scalar_lea.vmem [#allocation8], %s1125
          %1127 = dma.done %s1123, 2048
        $region68: #{tpu_custom_call.1} parent=63 // pred_fallthru
          _
        // Predicated region
        $region69: #{tpu_custom_call.1} parent=63 // pred_check
          %p1128 = pneg %p188
        $region70: #{tpu_custom_call.1} parent=63 // pred_check_branch
          %1130 = sbr.rel (%p1128) target = $region72
        $region71: #{tpu_custom_call.1} parent=63 // pred_region
          %s1131 = sand.u32 %s173, 1
          %s1132 = scalar_lea.sflag [#allocation10], %s1131
          %s1133 = sand.u32 %s173, 1
          %s1134 = smul.addr %s1133, 256
          %s1135 = scalar_lea.vmem [#allocation9], %s1134
          %1136 = dma.done %s1132, 4096
        $region72: #{tpu_custom_call.1} parent=63 // pred_fallthru
          _
      $region64: #{tpu_custom_call.1} parent=5 // pred_fallthru
        _
    $region6: #{tpu_custom_call.1} parent=1 // loop_footer
      %s27 = sadd.s32 1, %s23
    $region7: #{tpu_custom_call.1} parent=1 // loop_footer_branch
      %22 = sbr.rel target = $region3
    $region8: #{tpu_custom_call.1} parent=1 // loop_exit
      _
    %1137 = vsyncpa [#allocation3], 1
    %s1138 = scalar_lea.sflag [#allocation3], 1
    %1139 = vsyncpa %s1138, 1
    %1140 = vsyncpa [#allocation6], 1
    %1141 = vsyncpa [#allocation4], 1
    %s1142 = scalar_lea.sflag [#allocation4], 1
    %1143 = vsyncpa %s1142, 1
    %1144 = vsyncpa [#allocation10], 1
    %s1145 = scalar_lea.sflag [#allocation10], 1
    %1146 = vsyncpa %s1145, 1

// kernel: tpu_custom_call.1
$region0: #{tpu_custom_call.1}
  #allocation0 [shape = 'u32[]', space=smem, size = 0x4, offset = 0x4, fixed_abs, tag = 'smem constant byte address 0x4 - core index']
  #allocation1 [shape = 'u32[144,128]{1,0:T(1,128)}', space=vmem, size = 0x12000, scoped, tag = 'internal scratch']
  %s0 = inlined_call_operand.hbm [shape: f32[512,256], index: 0, kind: input, shape index: {}]
  %s1 = inlined_call_operand.hbm [shape: f32[256,128], index: 1, kind: input, shape index: {}]
  %s2 = inlined_call_operand.vmem [shape: f32[1,128], index: 2, kind: input, shape index: {}]
  %s3 = inlined_call_operand.hbm [shape: f32[128,256], index: 3, kind: input, shape index: {}]
  %s4 = inlined_call_operand.vmem [shape: f32[1,256], index: 4, kind: input, shape index: {}]
  %s5 = inlined_call_operand.hbm [shape: f32[512,128], index: 5, kind: output, shape index: {0}]
  %s6 = inlined_call_operand.hbm [shape: f32[512,256], index: 6, kind: output, shape index: {1}]
  %7 = xla_tuple %s5, %s6
  %s8 = sld [smem:[#allocation0]]
  $region73: #{tpu_custom_call.1} parent=0
    _
  %s10 = ssub.s32 1, %s8
  %s11 = scalar_select 0, %s10, %s8
  $region1: #{tpu_custom_call.1} parent=0
    #allocation2 [shape = 'u8[262144]{0}', space=vmem, size = 0x40000, scoped, tag = 'input window, operand 0']
    #allocation3 [shape = 's32[2]{0}', space=sflag, size = 0x8, scoped, tag = 'scoped memory for tpu_custom_call.1']
    #allocation4 [shape = 's32[2]{0}', space=sflag, size = 0x8, scoped, tag = 'scoped memory for tpu_custom_call.1']
    #allocation5 [shape = 'u8[131072]{0}', space=vmem, size = 0x20000, scoped, tag = 'input window, operand 1, single buffered']
    #allocation6 [shape = 's32[1]{0}', space=sflag, size = 0x4, scoped, tag = 'scoped memory for tpu_custom_call.1']
    #allocation7 [shape = 'u8[131072]{0}', space=vmem, size = 0x20000, scoped, tag = 'input window, operand 3, single buffered']
    #allocation8 [shape = 'u8[131072]{0}', space=vmem, size = 0x20000, scoped, tag = 'output window, operand 0']
    #allocation9 [shape = 'u8[262144]{0}', space=vmem, size = 0x40000, scoped, tag = 'output window, operand 1']
    #allocation10 [shape = 's32[2]{0}', space=sflag, size = 0x8, scoped, tag = 'scoped memory for tpu_custom_call.1']
    %12 = vsyncpa [#allocation3], 0
    %s13 = scalar_lea.sflag [#allocation3], 1
    %14 = vsyncpa %s13, 0
    %15 = vsyncpa [#allocation6], 0
    %16 = vsyncpa [#allocation4], 0
    %s17 = scalar_lea.sflag [#allocation4], 1
    %18 = vsyncpa %s17, 0
    %19 = vsyncpa [#allocation10], 0
    %s20 = scalar_lea.sflag [#allocation10], 1
    %21 = vsyncpa %s20, 0
    loop: start=0, step=1, limit=6
    $region2: #{tpu_custom_call.1} parent=1 // loop_pre_header
      _
    $region3: #{tpu_custom_call.1} parent=1 // loop_header
      %s23 = sphi 0, %s27
      %p24 = scmp.ge.s32.totalorder %s23, 6
      %s33 = sphi 0, %s35
      %s36 = sphi 0, %s33
      %s37 = sphi 0, %s36
      %s53 = sphi 0, %s37
      %s57 = sphi 0, %s57
      %s59 = sphi 0, %s57
      %s60 = sphi 0, %s59
      %s74 = sphi 0, %s60
      %s78 = sphi 0, %s78
      %s80 = sphi 0, %s78
      %s81 = sphi 0, %s80
      %s95 = sphi 0, %s81
      %s99 = sphi 0, %s99
      %s101 = sphi 0, %s99
      %s102 = sphi 0, %s101
      %s116 = sphi 0, %s102
      %s120 = sphi 0, %s120
      %s122 = sphi 0, %s120
      %s123 = sphi 0, %s122
      %s137 = sphi 0, %s123
      %s143 = sphi 0, %s145
      %s146 = sphi 0, %s143
      %s147 = sphi 0, %s146
      %s163 = sphi 0, %s147
      %s169 = sphi 0, %s171
      %s172 = sphi 0, %s169
      %s173 = sphi 0, %s172
      %s189 = sphi 0, %s173
    $region4: #{tpu_custom_call.1} parent=1 // loop_header_branch
      %26 = sbr.rel (%p24) target = $region8
    $region5: #{tpu_custom_call.1} parent=1 // loop_body
      %s28 = ssub.s32 %s23, 1
      %s29 = ssub.s32 %s23, 2
      %s30 = sadd.s32 %s23, 1
      %s31 = ssub.s32 %s23, %s30
      %p32 = scmp.eq.s32.totalorder %s31, 0
      %s34 = sadd.s32 %s33, 1
      %s35 = scalar_select %p32, %s33, %s34
      %p38 = pneg %p32
      %p39 = scmp.eq.s32.totalorder %s23, 3
      %p40 = por %p38, %p39
      %p41 = scmp.ne.s32.totalorder %s33, %s36
      %p42 = scmp.eq.s32.totalorder %s23, 0
      %p43 = por %p41, %p42
      %p44 = scmp.ne.s32.totalorder %s33, %s36
      %p45 = scmp.eq.s32.totalorder %s28, 3
      %p46 = por %p44, %p45
      %p47 = scmp.ne.s32.totalorder %s36, %s37
      %p48 = scmp.eq.s32.totalorder %s28, 0
      %p49 = por %p47, %p48
      %p50 = scmp.ne.s32.totalorder %s36, %s37
      %p51 = scmp.eq.s32.totalorder %s29, 3
      %p52 = por %p50, %p51
      %p54 = scmp.ne.s32.totalorder %s37, %s53
      %p55 = scmp.eq.s32.totalorder %s29, 0
      %p56 = por %p54, %p55
      %s58 = sadd.s32 %s57, 1
      %p61 = scmp.eq.s32.totalorder %s23, 3
      %p62 = scmp.ne.s32.totalorder %s57, %s59
      %p63 = scmp.eq.s32.totalorder %s23, 0
      %p64 = por %p62, %p63
      %p65 = scmp.ne.s32.totalorder %s57, %s59
      %p66 = scmp.eq.s32.totalorder %s28, 3
      %p67 = por %p65, %p66
      %p68 = scmp.ne.s32.totalorder %s59, %s60
      %p69 = scmp.eq.s32.totalorder %s28, 0
      %p70 = por %p68, %p69
      %p71 = scmp.ne.s32.totalorder %s59, %s60
      %p72 = scmp.eq.s32.totalorder %s29, 3
      %p73 = por %p71, %p72
      %p75 = scmp.ne.s32.totalorder %s60, %s74
      %p76 = scmp.eq.s32.totalorder %s29, 0
      %p77 = por %p75, %p76
      %s79 = sadd.s32 %s78, 1
      %p82 = scmp.eq.s32.totalorder %s23, 3
      %p83 = scmp.ne.s32.totalorder %s78, %s80
      %p84 = scmp.eq.s32.totalorder %s23, 0
      %p85 = por %p83, %p84
      %p86 = scmp.ne.s32.totalorder %s78, %s80
      %p87 = scmp.eq.s32.totalorder %s28, 3
      %p88 = por %p86, %p87
      %p89 = scmp.ne.s32.totalorder %s80, %s81
      %p90 = scmp.eq.s32.totalorder %s28, 0
      %p91 = por %p89, %p90
      %p92 = scmp.ne.s32.totalorder %s80, %s81
      %p93 = scmp.eq.s32.totalorder %s29, 3
      %p94 = por %p92, %p93
      %p96 = scmp.ne.s32.totalorder %s81, %s95
      %p97 = scmp.eq.s32.totalorder %s29, 0
      %p98 = por %p96, %p97
      %s100 = sadd.s32 %s99, 1
      %p103 = scmp.eq.s32.totalorder %s23, 3
      %p104 = scmp.ne.s32.totalorder %s99, %s101
      %p105 = scmp.eq.s32.totalorder %s23, 0
      %p106 = por %p104, %p105
      %p107 = scmp.ne.s32.totalorder %s99, %s101
      %p108 = scmp.eq.s32.totalorder %s28, 3
      %p109 = por %p107, %p108
      %p110 = scmp.ne.s32.totalorder %s101, %s102
      %p111 = scmp.eq.s32.totalorder %s28, 0
      %p112 = por %p110, %p111
      %p113 = scmp.ne.s32.totalorder %s101, %s102
      %p114 = scmp.eq.s32.totalorder %s29, 3
      %p115 = por %p113, %p114
      %p117 = scmp.ne.s32.totalorder %s102, %s116
      %p118 = scmp.eq.s32.totalorder %s29, 0
      %p119 = por %p117, %p118
      %s121 = sadd.s32 %s120, 1
      %p124 = scmp.eq.s32.totalorder %s23, 3
      %p125 = scmp.ne.s32.totalorder %s120, %s122
      %p126 = scmp.eq.s32.totalorder %s23, 0
      %p127 = por %p125, %p126
      %p128 = scmp.ne.s32.totalorder %s120, %s122
      %p129 = scmp.eq.s32.totalorder %s28, 3
      %p130 = por %p128, %p129
      %p131 = scmp.ne.s32.totalorder %s122, %s123
      %p132 = scmp.eq.s32.totalorder %s28, 0
      %p133 = por %p131, %p132
      %p134 = scmp.ne.s32.totalorder %s122, %s123
      %p135 = scmp.eq.s32.totalorder %s29, 3
      %p136 = por %p134, %p135
      %p138 = scmp.ne.s32.totalorder %s123, %s137
      %p139 = scmp.eq.s32.totalorder %s29, 0
      %p140 = por %p138, %p139
      %s141 = ssub.s32 %s23, %s30
      %p142 = scmp.eq.s32.totalorder %s141, 0
      %s144 = sadd.s32 %s143, 1
      %s145 = scalar_select %p142, %s143, %s144
      %p148 = pneg %p142
      %p149 = scmp.eq.s32.totalorder %s23, 3
      %p150 = por %p148, %p149
      %p151 = scmp.ne.s32.totalorder %s143, %s146
      %p152 = scmp.eq.s32.totalorder %s23, 0
      %p153 = por %p151, %p152
      %p154 = scmp.ne.s32.totalorder %s143, %s146
      %p155 = scmp.eq.s32.totalorder %s28, 3
      %p156 = por %p154, %p155
      %p157 = scmp.ne.s32.totalorder %s146, %s147
      %p158 = scmp.eq.s32.totalorder %s28, 0
      %p159 = por %p157, %p158
      %p160 = scmp.ne.s32.totalorder %s146, %s147
      %p161 = scmp.eq.s32.totalorder %s29, 3
      %p162 = por %p160, %p161
      %p164 = scmp.ne.s32.totalorder %s147, %s163
      %p165 = scmp.eq.s32.totalorder %s29, 0
      %p166 = por %p164, %p165
      %s167 = ssub.s32 %s23, %s30
      %p168 = scmp.eq.s32.totalorder %s167, 0
      %s170 = sadd.s32 %s169, 1
      %s171 = scalar_select %p168, %s169, %s170
      %p174 = pneg %p168
      %p175 = scmp.eq.s32.totalorder %s23, 3
      %p176 = por %p174, %p175
      %p177 = scmp.ne.s32.totalorder %s169, %s172
      %p178 = scmp.eq.s32.totalorder %s23, 0
      %p179 = por %p177, %p178
      %p180 = scmp.ne.s32.totalorder %s169, %s172
      %p181 = scmp.eq.s32.totalorder %s28, 3
      %p182 = por %p180, %p181
      %p183 = scmp.ne.s32.totalorder %s172, %s173
      %p184 = scmp.eq.s32.totalorder %s28, 0
      %p185 = por %p183, %p184
      %p186 = scmp.ne.s32.totalorder %s172, %s173
      %p187 = scmp.eq.s32.totalorder %s29, 3
      %p188 = por %p186, %p187
      %p190 = scmp.ne.s32.totalorder %s173, %s189
      %p191 = scmp.eq.s32.totalorder %s29, 0
      %p192 = por %p190, %p191
      %p193 = scmp.le.s32.totalorder 1, %s23
      %p194 = scmp.lt.s32.totalorder %s23, 5
      %p195 = pnand %p193, %p194
      %p196 = pneg %p195
      // Predicated region
      $region9: #{tpu_custom_call.1} parent=5 // pred_check
        _
      $region10: #{tpu_custom_call.1} parent=5 // pred_check_branch
        %198 = sbr.rel (%p195) target = $region12
      $region11: #{tpu_custom_call.1} parent=5 // pred_region
        %s199 = ssub.s32 %s23, 1
        // Predicated region
        $region13: #{tpu_custom_call.1} parent=11 // pred_check
          %p200 = pneg %p70
        $region14: #{tpu_custom_call.1} parent=11 // pred_check_branch
          %202 = sbr.rel (%p200) target = $region16
        $region15: #{tpu_custom_call.1} parent=11 // pred_region
          %s204 = ssub.s32 4096, 4096
          %205 = vsyncadd [#allocation6], %s204
          %s206 = sshll.u32 [#allocation5], 4
          %s207 = int_to_ptr.vmem [resolvable:$true] %s206
          %212 = dma.hbm_to_vmem [thread:$0]  %s1, 4096, %s207, [#allocation6], 128, 128, 8
        $region16: #{tpu_custom_call.1} parent=11 // pred_fallthru
          _
        // Predicated region
        $region17: #{tpu_custom_call.1} parent=11 // pred_check
          %p213 = pneg %p91
        $region18: #{tpu_custom_call.1} parent=11 // pred_check_branch
          %215 = sbr.rel (%p213) target = $region20
        $region19: #{tpu_custom_call.1} parent=11 // pred_region
          _
        $region20: #{tpu_custom_call.1} parent=11 // pred_fallthru
          _
        // Predicated region
        $region21: #{tpu_custom_call.1} parent=11 // pred_check
          %p216 = pneg %p112
        $region22: #{tpu_custom_call.1} parent=11 // pred_check_branch
          %218 = sbr.rel (%p216) target = $region24
        $region23: #{tpu_custom_call.1} parent=11 // pred_region
          %s220 = ssub.s32 4096, 4096
          %221 = vsyncadd [#allocation6], %s220
          %s222 = sshll.u32 [#allocation7], 4
          %s223 = int_to_ptr.vmem [resolvable:$true] %s222
          %228 = dma.hbm_to_vmem [thread:$0]  %s3, 4096, %s223, [#allocation6], 256, 256, 16
        $region24: #{tpu_custom_call.1} parent=11 // pred_fallthru
          _
        // Predicated region
        $region25: #{tpu_custom_call.1} parent=11 // pred_check
          %p229 = pneg %p133
        $region26: #{tpu_custom_call.1} parent=11 // pred_check_branch
          %231 = sbr.rel (%p229) target = $region28
        $region27: #{tpu_custom_call.1} parent=11 // pred_region
          _
        $region28: #{tpu_custom_call.1} parent=11 // pred_fallthru
          _
      $region12: #{tpu_custom_call.1} parent=5 // pred_fallthru
        _
      %p232 = scmp.lt.s32.totalorder %s23, 4
      // Predicated region
      $region29: #{tpu_custom_call.1} parent=5 // pred_check
        %p233 = pneg %p232
      $region30: #{tpu_custom_call.1} parent=5 // pred_check_branch
        %235 = sbr.rel (%p233) target = $region32
      $region31: #{tpu_custom_call.1} parent=5 // pred_region
        // Predicated region
        $region33: #{tpu_custom_call.1} parent=31 // pred_check
          %p236 = pneg %p43
        $region34: #{tpu_custom_call.1} parent=31 // pred_check_branch
          %238 = sbr.rel (%p236) target = $region36
        $region35: #{tpu_custom_call.1} parent=31 // pred_region
          %s239 = sand.u32 %s33, 1
          %s240 = scalar_lea.sflag [#allocation3], %s239
          %s241 = sand.u32 %s33, 1
          %s242 = smul.addr %s241, 256
          %s243 = scalar_lea.vmem [#allocation2], %s242
          %s244 = smul.u32 16, %s23
          %s246 = ssub.s32 4096, 4096
          %247 = vsyncadd %s240, %s246
          %s248 = smul.addr %s244, 2
          %s249 = smul.addr %s248, 128
          %s250 = scalar_lea.hbm %s0, %s249
          %s251 = sshll.u32 %s243, 4
          %s252 = int_to_ptr.vmem [resolvable:$true] %s251
          %257 = dma.hbm_to_vmem [thread:$0]  %s250, 4096, %s252, %s240, 256, 256, 16
        $region36: #{tpu_custom_call.1} parent=31 // pred_fallthru
          _
      $region32: #{tpu_custom_call.1} parent=5 // pred_fallthru
        _
      %p258 = scmp.le.s32.totalorder 1, %s23
      %p259 = scmp.lt.s32.totalorder %s23, 5
      %p260 = pnand %p258, %p259
      %p261 = pneg %p260
      // Predicated region
      $region37: #{tpu_custom_call.1} parent=5 // pred_check
        _
      $region38: #{tpu_custom_call.1} parent=5 // pred_check_branch
        %263 = sbr.rel (%p260) target = $region40
      $region39: #{tpu_custom_call.1} parent=5 // pred_region
        %s264 = ssub.s32 %s23, 1
        %s265 = sand.u32 %s36, 1
        %s266 = scalar_lea.sflag [#allocation3], %s265
        %s267 = sand.u32 %s36, 1
        %s268 = smul.addr %s267, 256
        %s269 = scalar_lea.vmem [#allocation2], %s268
        // Predicated region
        $region41: #{tpu_custom_call.1} parent=39 // pred_check
          %p270 = pneg %p49
        $region42: #{tpu_custom_call.1} parent=39 // pred_check_branch
          %272 = sbr.rel (%p270) target = $region44
        $region43: #{tpu_custom_call.1} parent=39 // pred_region
          %273 = dma.done %s266, 4096
        $region44: #{tpu_custom_call.1} parent=39 // pred_fallthru
          _
        // Predicated region
        $region45: #{tpu_custom_call.1} parent=39 // pred_check
          %p274 = pneg %p70
        $region46: #{tpu_custom_call.1} parent=39 // pred_check_branch
          %276 = sbr.rel (%p274) target = $region48
        $region47: #{tpu_custom_call.1} parent=39 // pred_region
          %277 = dma.done [#allocation6], 4096
        $region48: #{tpu_custom_call.1} parent=39 // pred_fallthru
          _
        // Predicated region
        $region49: #{tpu_custom_call.1} parent=39 // pred_check
          %p278 = pneg %p112
        $region50: #{tpu_custom_call.1} parent=39 // pred_check_branch
          %280 = sbr.rel (%p278) target = $region52
        $region51: #{tpu_custom_call.1} parent=39 // pred_region
          %281 = dma.done [#allocation6], 4096
        $region52: #{tpu_custom_call.1} parent=39 // pred_fallthru
          _
        %s282 = sand.u32 %s36, 1
        %s283 = scalar_lea.sflag [#allocation3], %s282
        %s284 = sand.u32 %s36, 1
        %s285 = smul.addr %s284, 256
        %s286 = scalar_lea.vmem [#allocation2], %s285
        %p287 = pneg %p49
        %p288 = pneg %p46
        %p289 = pneg %p70
        %p290 = pneg %p67
        %p291 = pneg %p91
        %p292 = pneg %p88
        %p293 = pneg %p112
        %p294 = pneg %p109
        %p295 = pneg %p133
        %p296 = pneg %p130
        %p297 = pneg %p159
        %p298 = pneg %p156
        %s299 = sand.u32 %s146, 1
        %s300 = scalar_lea.sflag [#allocation4], %s299
        %s301 = sand.u32 %s146, 1
        %s302 = smul.addr %s301, 128
        %s303 = scalar_lea.vmem [#allocation8], %s302
        %p304 = pneg %p185
        %p305 = pneg %p182
        %s306 = sand.u32 %s172, 1
        %s307 = scalar_lea.sflag [#allocation10], %s306
        %s308 = sand.u32 %s172, 1
        %s309 = smul.addr %s308, 256
        %s310 = scalar_lea.vmem [#allocation9], %s309
        %s311 = smul.u32 16, %s28
        %s312 = smul.u32 16, %s28
        %s313 = smul.u32 16, %s28
        %v314 = vld [vmem:[%s269] sm:$0xff]
        %v315 = vld [vmem:[%s269 + $0x8] sm:$0xff]
        %v316 = vld [vmem:[%s269 + $0x10] sm:$0xff]
        %v317 = vld [vmem:[%s269 + $0x18] sm:$0xff]
        %v318 = vld [vmem:[%s269 + $0x20] sm:$0xff]
        %v319 = vld [vmem:[%s269 + $0x28] sm:$0xff]
        %v320 = vld [vmem:[%s269 + $0x30] sm:$0xff]
        %v321 = vld [vmem:[%s269 + $0x38] sm:$0xff]
        %v322 = vld [vmem:[%s269 + $0x40] sm:$0xff]
        %v323 = vld [vmem:[%s269 + $0x48] sm:$0xff]
        %v324 = vld [vmem:[%s269 + $0x50] sm:$0xff]
        %v325 = vld [vmem:[%s269 + $0x58] sm:$0xff]
        %v326 = vld [vmem:[%s269 + $0x60] sm:$0xff]
        %v327 = vld [vmem:[%s269 + $0x68] sm:$0xff]
        %v328 = vld [vmem:[%s269 + $0x70] sm:$0xff]
        %v329 = vld [vmem:[%s269 + $0x78] sm:$0xff]
        %v330 = vld [vmem:[%s269 + $0x80] sm:$0xff]
        %v331 = vld [vmem:[%s269 + $0x88] sm:$0xff]
        %v332 = vld [vmem:[%s269 + $0x90] sm:$0xff]
        %v333 = vld [vmem:[%s269 + $0x98] sm:$0xff]
        %v334 = vld [vmem:[%s269 + $0xa0] sm:$0xff]
        %v335 = vld [vmem:[%s269 + $0xa8] sm:$0xff]
        %v336 = vld [vmem:[%s269 + $0xb0] sm:$0xff]
        %v337 = vld [vmem:[%s269 + $0xb8] sm:$0xff]
        %v338 = vld [vmem:[%s269 + $0xc0] sm:$0xff]
        %v339 = vld [vmem:[%s269 + $0xc8] sm:$0xff]
        %v340 = vld [vmem:[%s269 + $0xd0] sm:$0xff]
        %v341 = vld [vmem:[%s269 + $0xd8] sm:$0xff]
        %v342 = vld [vmem:[%s269 + $0xe0] sm:$0xff]
        %v343 = vld [vmem:[%s269 + $0xe8] sm:$0xff]
        %v344 = vld [vmem:[%s269 + $0xf0] sm:$0xff]
        %v345 = vld [vmem:[%s269 + $0xf8] sm:$0xff]
        %v346 = vld [vmem:[#allocation5] sm:$0xff]
        %v347 = vld [vmem:[#allocation5 + $0x8] sm:$0xff]
        %v348 = vld [vmem:[#allocation5 + $0x10] sm:$0xff]
        %v349 = vld [vmem:[#allocation5 + $0x18] sm:$0xff]
        %v350 = vld [vmem:[#allocation5 + $0x20] sm:$0xff]
        %v351 = vld [vmem:[#allocation5 + $0x28] sm:$0xff]
        %v352 = vld [vmem:[#allocation5 + $0x30] sm:$0xff]
        %v353 = vld [vmem:[#allocation5 + $0x38] sm:$0xff]
        %v354 = vld [vmem:[#allocation5 + $0x40] sm:$0xff]
        %v355 = vld [vmem:[#allocation5 + $0x48] sm:$0xff]
        %v356 = vld [vmem:[#allocation5 + $0x50] sm:$0xff]
        %v357 = vld [vmem:[#allocation5 + $0x58] sm:$0xff]
        %v358 = vld [vmem:[#allocation5 + $0x60] sm:$0xff]
        %v359 = vld [vmem:[#allocation5 + $0x68] sm:$0xff]
        %v360 = vld [vmem:[#allocation5 + $0x70] sm:$0xff]
        %v361 = vld [vmem:[#allocation5 + $0x78] sm:$0xff]
        %v362 = vld [vmem:[#allocation5 + $0x80] sm:$0xff]
        %v363 = vld [vmem:[#allocation5 + $0x88] sm:$0xff]
        %v364 = vld [vmem:[#allocation5 + $0x90] sm:$0xff]
        %v365 = vld [vmem:[#allocation5 + $0x98] sm:$0xff]
        %v366 = vld [vmem:[#allocation5 + $0xa0] sm:$0xff]
        %v367 = vld [vmem:[#allocation5 + $0xa8] sm:$0xff]
        %v368 = vld [vmem:[#allocation5 + $0xb0] sm:$0xff]
        %v369 = vld [vmem:[#allocation5 + $0xb8] sm:$0xff]
        %v370 = vld [vmem:[#allocation5 + $0xc0] sm:$0xff]
        %v371 = vld [vmem:[#allocation5 + $0xc8] sm:$0xff]
        %v372 = vld [vmem:[#allocation5 + $0xd0] sm:$0xff]
        %v373 = vld [vmem:[#allocation5 + $0xd8] sm:$0xff]
        %v374 = vld [vmem:[#allocation5 + $0xe0] sm:$0xff]
        %v375 = vld [vmem:[#allocation5 + $0xe8] sm:$0xff]
        %v376 = vld [vmem:[#allocation5 + $0xf0] sm:$0xff]
        %v377 = vld [vmem:[#allocation5 + $0xf8] sm:$0xff]
        %v378 = vld [vmem:[%s2] sm:$0x1]
        %v380 = vlaneseq
        %v381 = vshrl.u32 %v380, 7
        %v382 = vsub.s32 0, %v381
        %v383 = vrot.slane %v378, %v382
        %385 = vmatprep.subr.mxu0 0.0
        %386 = vmatpush1.msra.mxu0 %v361
        %387 = vmatprep.subr.mxu0 0.0
        %388 = vmatpush1.msra.mxu0 %v360
        %389 = vmatprep.subr.mxu0 0.0
        %390 = vmatpush1.msra.mxu0 %v359
        %391 = vmatprep.subr.mxu0 0.0
        %392 = vmatpush1.msra.mxu0 %v358
        %393 = vmatprep.subr.mxu0 0.0
        %394 = vmatpush1.msra.mxu0 %v357
        %395 = vmatprep.subr.mxu0 0.0
        %396 = vmatpush1.msra.mxu0 %v356
        %397 = vmatprep.subr.mxu0 0.0
        %398 = vmatpush1.msra.mxu0 %v355
        %399 = vmatprep.subr.mxu0 0.0
        %400 = vmatpush1.msra.mxu0 %v354
        %401 = vmatprep.subr.mxu0 0.0
        %402 = vmatpush1.msra.mxu0 %v353
        %403 = vmatprep.subr.mxu0 0.0
        %404 = vmatpush1.msra.mxu0 %v352
        %405 = vmatprep.subr.mxu0 0.0
        %406 = vmatpush1.msra.mxu0 %v351
        %407 = vmatprep.subr.mxu0 0.0
        %408 = vmatpush1.msra.mxu0 %v350
        %409 = vmatprep.subr.mxu0 0.0
        %410 = vmatpush1.msra.mxu0 %v349
        %411 = vmatprep.subr.mxu0 0.0
        %412 = vmatpush1.msra.mxu0 %v348
        %413 = vmatprep.subr.mxu0 0.0
        %414 = vmatpush1.msra.mxu0 %v347
        %415 = vmatprep.subr.mxu0 0.0
        %416 = vmatpush1.msra.mxu0 %v346
        %417 = vmatprep.subr.mxu0 0.0
        %418 = vmatpush2.msra.mxu0 %v377
        %419 = vmatprep.subr.mxu0 0.0
        %420 = vmatpush2.msra.mxu0 %v376
        %421 = vmatprep.subr.mxu0 0.0
        %422 = vmatpush2.msra.mxu0 %v375
        %423 = vmatprep.subr.mxu0 0.0
        %424 = vmatpush2.msra.mxu0 %v374
        %425 = vmatprep.subr.mxu0 0.0
        %426 = vmatpush2.msra.mxu0 %v373
        %427 = vmatprep.subr.mxu0 0.0
        %428 = vmatpush2.msra.mxu0 %v372
        %429 = vmatprep.subr.mxu0 0.0
        %430 = vmatpush2.msra.mxu0 %v371
        %431 = vmatprep.subr.mxu0 0.0
        %432 = vmatpush2.msra.mxu0 %v370
        %433 = vmatprep.subr.mxu0 0.0
        %434 = vmatpush2.msra.mxu0 %v369
        %435 = vmatprep.subr.mxu0 0.0
        %436 = vmatpush2.msra.mxu0 %v368
        %437 = vmatprep.subr.mxu0 0.0
        %438 = vmatpush2.msra.mxu0 %v367
        %439 = vmatprep.subr.mxu0 0.0
        %440 = vmatpush2.msra.mxu0 %v366
        %441 = vmatprep.subr.mxu0 0.0
        %442 = vmatpush2.msra.mxu0 %v365
        %443 = vmatprep.subr.mxu0 0.0
        %444 = vmatpush2.msra.mxu0 %v364
        %445 = vmatprep.subr.mxu0 0.0
        %446 = vmatpush2.msra.mxu0 %v363
        %447 = vmatprep.subr.mxu0 0.0
        %448 = vmatpush2.msra.mxu0 %v362
        %449 = vmatprep.mubr.f32.mxu0 %v315
        %450 = vmatmul.mubr.f32.gmra.mxu0 %v314
        %v451 = vpop.f32.mrf.mxu0
        %v452 = vadd.f32 %v383, %v451
        %v453 = vpop.f32.mrf.mxu0
        %454 = vmatprep.mubr.f32.mxu0 %v317
        %455 = vmatmul.mubr.f32.gmra.mxu0 %v316
        %v456 = vpop.f32.mrf.mxu0
        %v457 = vadd.f32 %v383, %v456
        %v458 = vpop.f32.mrf.mxu0
        %459 = vmatprep.mubr.f32.mxu0 %v319
        %460 = vmatmul.mubr.f32.gmra.mxu0 %v318
        %v461 = vpop.f32.mrf.mxu0
        %v462 = vadd.f32 %v383, %v461
        %v463 = vpop.f32.mrf.mxu0
        %464 = vmatprep.mubr.f32.mxu0 %v321
        %465 = vmatmul.mubr.f32.gmra.mxu0 %v320
        %v466 = vpop.f32.mrf.mxu0
        %v467 = vadd.f32 %v383, %v466
        %v468 = vpop.f32.mrf.mxu0
        %469 = vmatprep.mubr.f32.mxu0 %v323
        %470 = vmatmul.mubr.f32.gmra.mxu0 %v322
        %v471 = vpop.f32.mrf.mxu0
        %v472 = vadd.f32 %v383, %v471
        %v473 = vpop.f32.mrf.mxu0
        %474 = vmatprep.mubr.f32.mxu0 %v325
        %475 = vmatmul.mubr.f32.gmra.mxu0 %v324
        %v476 = vpop.f32.mrf.mxu0
        %v477 = vadd.f32 %v383, %v476
        %v478 = vpop.f32.mrf.mxu0
        %479 = vmatprep.mubr.f32.mxu0 %v327
        %480 = vmatmul.mubr.f32.gmra.mxu0 %v326
        %v481 = vpop.f32.mrf.mxu0
        %v482 = vadd.f32 %v383, %v481
        %v483 = vpop.f32.mrf.mxu0
        %484 = vmatprep.mubr.f32.mxu0 %v329
        %485 = vmatmul.mubr.f32.gmra.mxu0 %v328
        %v486 = vpop.f32.mrf.mxu0
        %v487 = vadd.f32 %v383, %v486
        %v488 = vpop.f32.mrf.mxu0
        %489 = vmatprep.mubr.f32.mxu0 %v331
        %490 = vmatmul.mubr.f32.gmra.mxu0 %v330
        %v491 = vpop.f32.mrf.mxu0
        %v492 = vadd.f32 %v383, %v491
        %v493 = vpop.f32.mrf.mxu0
        %494 = vmatprep.mubr.f32.mxu0 %v333
        %495 = vmatmul.mubr.f32.gmra.mxu0 %v332
        %v496 = vpop.f32.mrf.mxu0
        %v497 = vadd.f32 %v383, %v496
        %v498 = vpop.f32.mrf.mxu0
        %499 = vmatprep.mubr.f32.mxu0 %v335
        %500 = vmatmul.mubr.f32.gmra.mxu0 %v334
        %v501 = vpop.f32.mrf.mxu0
        %v502 = vadd.f32 %v383, %v501
        %v503 = vpop.f32.mrf.mxu0
        %504 = vmatprep.mubr.f32.mxu0 %v337
        %505 = vmatmul.mubr.f32.gmra.mxu0 %v336
        %v506 = vpop.f32.mrf.mxu0
        %v507 = vadd.f32 %v383, %v506
        %v508 = vpop.f32.mrf.mxu0
        %509 = vmatprep.mubr.f32.mxu0 %v339
        %510 = vmatmul.mubr.f32.gmra.mxu0 %v338
        %v511 = vpop.f32.mrf.mxu0
        %v512 = vadd.f32 %v383, %v511
        %v513 = vpop.f32.mrf.mxu0
        %514 = vmatprep.mubr.f32.mxu0 %v341
        %515 = vmatmul.mubr.f32.gmra.mxu0 %v340
        %v516 = vpop.f32.mrf.mxu0
        %v517 = vadd.f32 %v383, %v516
        %v518 = vpop.f32.mrf.mxu0
        %519 = vmatprep.mubr.f32.mxu0 %v343
        %520 = vmatmul.mubr.f32.gmra.mxu0 %v342
        %v521 = vpop.f32.mrf.mxu0
        %v522 = vadd.f32 %v383, %v521
        %v523 = vpop.f32.mrf.mxu0
        %524 = vmatprep.mubr.f32.mxu0 %v345
        %525 = vmatmul.mubr.f32.gmra.mxu0 %v344
        %v526 = vpop.f32.mrf.mxu0
        %v527 = vadd.f32 %v383, %v526
        %v528 = vpop.f32.mrf.mxu0
        %529 = vdwg.mxu0
        %v530 = vsub.f32 0.0, %v452
        %v531 = vsub.f32 0.0, %v457
        %v532 = vsub.f32 0.0, %v462
        %v533 = vsub.f32 0.0, %v467
        %v534 = vsub.f32 0.0, %v472
        %v535 = vsub.f32 0.0, %v477
        %v536 = vsub.f32 0.0, %v482
        %v537 = vsub.f32 0.0, %v487
        %v538 = vsub.f32 0.0, %v492
        %v539 = vsub.f32 0.0, %v497
        %v540 = vsub.f32 0.0, %v502
        %v541 = vsub.f32 0.0, %v507
        %v542 = vsub.f32 0.0, %v512
        %v543 = vsub.f32 0.0, %v517
        %v544 = vsub.f32 0.0, %v522
        %v545 = vsub.f32 0.0, %v527
        %v546 = vmul.f32 %v530, 1.442695
        %v547 = vpow.pop %v546
        %v548 = vmul.f32 %v531, 1.442695
        %v549 = vpow.pop %v548
        %v550 = vmul.f32 %v532, 1.442695
        %v551 = vpow.pop %v550
        %v552 = vmul.f32 %v533, 1.442695
        %v553 = vpow.pop %v552
        %v554 = vmul.f32 %v534, 1.442695
        %v555 = vpow.pop %v554
        %v556 = vmul.f32 %v535, 1.442695
        %v557 = vpow.pop %v556
        %v558 = vmul.f32 %v536, 1.442695
        %v559 = vpow.pop %v558
        %v560 = vmul.f32 %v537, 1.442695
        %v561 = vpow.pop %v560
        %v562 = vmul.f32 %v538, 1.442695
        %v563 = vpow.pop %v562
        %v564 = vmul.f32 %v539, 1.442695
        %v565 = vpow.pop %v564
        %v566 = vmul.f32 %v540, 1.442695
        %v567 = vpow.pop %v566
        %v568 = vmul.f32 %v541, 1.442695
        %v569 = vpow.pop %v568
        %v570 = vmul.f32 %v542, 1.442695
        %v571 = vpow.pop %v570
        %v572 = vmul.f32 %v543, 1.442695
        %v573 = vpow.pop %v572
        %v574 = vmul.f32 %v544, 1.442695
        %v575 = vpow.pop %v574
        %v576 = vmul.f32 %v545, 1.442695
        %v577 = vpow.pop %v576
        %v578 = vadd.f32 %v547, 1.0
        %v579 = vadd.f32 %v549, 1.0
        %v580 = vadd.f32 %v551, 1.0
        %v581 = vadd.f32 %v553, 1.0
        %v582 = vadd.f32 %v555, 1.0
        %v583 = vadd.f32 %v557, 1.0
        %v584 = vadd.f32 %v559, 1.0
        %v585 = vadd.f32 %v561, 1.0
        %v586 = vadd.f32 %v563, 1.0
        %v587 = vadd.f32 %v565, 1.0
        %v588 = vadd.f32 %v567, 1.0
        %v589 = vadd.f32 %v569, 1.0
        %v590 = vadd.f32 %v571, 1.0
        %v591 = vadd.f32 %v573, 1.0
        %v592 = vadd.f32 %v575, 1.0
        %v593 = vadd.f32 %v577, 1.0
        %v594 = vrcp.pop %v578
        %v595 = vmul.f32 1.0, %v594
        %v596 = vrcp.pop %v579
        %v597 = vmul.f32 1.0, %v596
        %v598 = vrcp.pop %v580
        %v599 = vmul.f32 1.0, %v598
        %v600 = vrcp.pop %v581
        %v601 = vmul.f32 1.0, %v600
        %v602 = vrcp.pop %v582
        %v603 = vmul.f32 1.0, %v602
        %v604 = vrcp.pop %v583
        %v605 = vmul.f32 1.0, %v604
        %v606 = vrcp.pop %v584
        %v607 = vmul.f32 1.0, %v606
        %v608 = vrcp.pop %v585
        %v609 = vmul.f32 1.0, %v608
        %v610 = vrcp.pop %v586
        %v611 = vmul.f32 1.0, %v610
        %v612 = vrcp.pop %v587
        %v613 = vmul.f32 1.0, %v612
        %v614 = vrcp.pop %v588
        %v615 = vmul.f32 1.0, %v614
        %v616 = vrcp.pop %v589
        %v617 = vmul.f32 1.0, %v616
        %v618 = vrcp.pop %v590
        %v619 = vmul.f32 1.0, %v618
        %v620 = vrcp.pop %v591
        %v621 = vmul.f32 1.0, %v620
        %v622 = vrcp.pop %v592
        %v623 = vmul.f32 1.0, %v622
        %v624 = vrcp.pop %v593
        %v625 = vmul.f32 1.0, %v624
        %626 = vst [vmem:[%s303] sm:$0xff] %v595
        %627 = vst [vmem:[%s303 + $0x8] sm:$0xff] %v597
        %628 = vst [vmem:[%s303 + $0x10] sm:$0xff] %v599
        %629 = vst [vmem:[%s303 + $0x18] sm:$0xff] %v601
        %630 = vst [vmem:[%s303 + $0x20] sm:$0xff] %v603
        %631 = vst [vmem:[%s303 + $0x28] sm:$0xff] %v605
        %632 = vst [vmem:[%s303 + $0x30] sm:$0xff] %v607
        %633 = vst [vmem:[%s303 + $0x38] sm:$0xff] %v609
        %634 = vst [vmem:[%s303 + $0x40] sm:$0xff] %v611
        %635 = vst [vmem:[%s303 + $0x48] sm:$0xff] %v613
        %636 = vst [vmem:[%s303 + $0x50] sm:$0xff] %v615
        %637 = vst [vmem:[%s303 + $0x58] sm:$0xff] %v617
        %638 = vst [vmem:[%s303 + $0x60] sm:$0xff] %v619
        %639 = vst [vmem:[%s303 + $0x68] sm:$0xff] %v621
        %640 = vst [vmem:[%s303 + $0x70] sm:$0xff] %v623
        %641 = vst [vmem:[%s303 + $0x78] sm:$0xff] %v625
        %v642 = vld [vmem:[#allocation7] sm:$0xff]
        %v643 = vld [vmem:[#allocation7 + $0x8] sm:$0xff]
        %v644 = vld [vmem:[#allocation7 + $0x10] sm:$0xff]
        %v645 = vld [vmem:[#allocation7 + $0x18] sm:$0xff]
        %v646 = vld [vmem:[#allocation7 + $0x20] sm:$0xff]
        %v647 = vld [vmem:[#allocation7 + $0x28] sm:$0xff]
        %v648 = vld [vmem:[#allocation7 + $0x30] sm:$0xff]
        %v649 = vld [vmem:[#allocation7 + $0x38] sm:$0xff]
        %v650 = vld [vmem:[#allocation7 + $0x40] sm:$0xff]
        %v651 = vld [vmem:[#allocation7 + $0x48] sm:$0xff]
        %v652 = vld [vmem:[#allocation7 + $0x50] sm:$0xff]
        %v653 = vld [vmem:[#allocation7 + $0x58] sm:$0xff]
        %v654 = vld [vmem:[#allocation7 + $0x60] sm:$0xff]
        %v655 = vld [vmem:[#allocation7 + $0x68] sm:$0xff]
        %v656 = vld [vmem:[#allocation7 + $0x70] sm:$0xff]
        %v657 = vld [vmem:[#allocation7 + $0x78] sm:$0xff]
        %v658 = vld [vmem:[#allocation7 + $0x80] sm:$0xff]
        %v659 = vld [vmem:[#allocation7 + $0x88] sm:$0xff]
        %v660 = vld [vmem:[#allocation7 + $0x90] sm:$0xff]
        %v661 = vld [vmem:[#allocation7 + $0x98] sm:$0xff]
        %v662 = vld [vmem:[#allocation7 + $0xa0] sm:$0xff]
        %v663 = vld [vmem:[#allocation7 + $0xa8] sm:$0xff]
        %v664 = vld [vmem:[#allocation7 + $0xb0] sm:$0xff]
        %v665 = vld [vmem:[#allocation7 + $0xb8] sm:$0xff]
        %v666 = vld [vmem:[#allocation7 + $0xc0] sm:$0xff]
        %v667 = vld [vmem:[#allocation7 + $0xc8] sm:$0xff]
        %v668 = vld [vmem:[#allocation7 + $0xd0] sm:$0xff]
        %v669 = vld [vmem:[#allocation7 + $0xd8] sm:$0xff]
        %v670 = vld [vmem:[#allocation7 + $0xe0] sm:$0xff]
        %v671 = vld [vmem:[#allocation7 + $0xe8] sm:$0xff]
        %v672 = vld [vmem:[#allocation7 + $0xf0] sm:$0xff]
        %v673 = vld [vmem:[#allocation7 + $0xf8] sm:$0xff]
        %v674 = vld [vmem:[%s4] sm:$0x3]
        %v676 = vlaneseq
        %v677 = vshrl.u32 %v676, 7
        %v678 = vsub.s32 0, %v677
        %v679 = vrot.slane %v674, %v678
        %v680 = vlaneseq
        %v681 = vshrl.u32 %v680, 7
        %v682 = vsub.s32 1, %v681
        %v683 = vrot.slane %v674, %v682
        %686 = vmatprep.subr.mxu0 %v673
        %687 = vmatpush1.msra.mxu0 %v672
        %688 = vmatprep.subr.mxu0 %v671
        %689 = vmatpush1.msra.mxu0 %v670
        %690 = vmatprep.subr.mxu0 %v669
        %691 = vmatpush1.msra.mxu0 %v668
        %692 = vmatprep.subr.mxu0 %v667
        %693 = vmatpush1.msra.mxu0 %v666
        %694 = vmatprep.subr.mxu0 %v665
        %695 = vmatpush1.msra.mxu0 %v664
        %696 = vmatprep.subr.mxu0 %v663
        %697 = vmatpush1.msra.mxu0 %v662
        %698 = vmatprep.subr.mxu0 %v661
        %699 = vmatpush1.msra.mxu0 %v660
        %700 = vmatprep.subr.mxu0 %v659
        %701 = vmatpush1.msra.mxu0 %v658
        %702 = vmatprep.subr.mxu0 %v657
        %703 = vmatpush1.msra.mxu0 %v656
        %704 = vmatprep.subr.mxu0 %v655
        %705 = vmatpush1.msra.mxu0 %v654
        %706 = vmatprep.subr.mxu0 %v653
        %707 = vmatpush1.msra.mxu0 %v652
        %708 = vmatprep.subr.mxu0 %v651
        %709 = vmatpush1.msra.mxu0 %v650
        %710 = vmatprep.subr.mxu0 %v649
        %711 = vmatpush1.msra.mxu0 %v648
        %712 = vmatprep.subr.mxu0 %v647
        %713 = vmatpush1.msra.mxu0 %v646
        %714 = vmatprep.subr.mxu0 %v645
        %715 = vmatpush1.msra.mxu0 %v644
        %716 = vmatprep.subr.mxu0 %v643
        %717 = vmatpush1.msra.mxu0 %v642
        %718 = vmatprep.subr.mxu0 0.0
        %719 = vmatpush2.msra.mxu0 0.0
        %720 = vmatprep.subr.mxu0 0.0
        %721 = vmatpush2.msra.mxu0 0.0
        %722 = vmatprep.subr.mxu0 0.0
        %723 = vmatpush2.msra.mxu0 0.0
        %724 = vmatprep.subr.mxu0 0.0
        %725 = vmatpush2.msra.mxu0 0.0
        %726 = vmatprep.subr.mxu0 0.0
        %727 = vmatpush2.msra.mxu0 0.0
        %728 = vmatprep.subr.mxu0 0.0
        %729 = vmatpush2.msra.mxu0 0.0
        %730 = vmatprep.subr.mxu0 0.0
        %731 = vmatpush2.msra.mxu0 0.0
        %732 = vmatprep.subr.mxu0 0.0
        %733 = vmatpush2.msra.mxu0 0.0
        %734 = vmatprep.subr.mxu0 0.0
        %735 = vmatpush2.msra.mxu0 0.0
        %736 = vmatprep.subr.mxu0 0.0
        %737 = vmatpush2.msra.mxu0 0.0
        %738 = vmatprep.subr.mxu0 0.0
        %739 = vmatpush2.msra.mxu0 0.0
        %740 = vmatprep.subr.mxu0 0.0
        %741 = vmatpush2.msra.mxu0 0.0
        %742 = vmatprep.subr.mxu0 0.0
        %743 = vmatpush2.msra.mxu0 0.0
        %744 = vmatprep.subr.mxu0 0.0
        %745 = vmatpush2.msra.mxu0 0.0
        %746 = vmatprep.subr.mxu0 0.0
        %747 = vmatpush2.msra.mxu0 0.0
        %748 = vmatprep.subr.mxu0 0.0
        %749 = vmatpush2.msra.mxu0 0.0
        %750 = vmatprep.mubr.f32.mxu0 0.0
        %751 = vmatmul.mubr.f32.gmra.mxu0 %v595
        %v752 = vpop.f32.mrf.mxu0
        %v753 = vadd.f32 %v679, %v752
        %v754 = vpop.f32.mrf.mxu0
        %v755 = vadd.f32 %v683, %v754
        %756 = vmatprep.mubr.f32.mxu0 0.0
        %757 = vmatmul.mubr.f32.gmra.mxu0 %v597
        %v758 = vpop.f32.mrf.mxu0
        %v759 = vadd.f32 %v679, %v758
        %v760 = vpop.f32.mrf.mxu0
        %v761 = vadd.f32 %v683, %v760
        %762 = vmatprep.mubr.f32.mxu0 0.0
        %763 = vmatmul.mubr.f32.gmra.mxu0 %v599
        %v764 = vpop.f32.mrf.mxu0
        %v765 = vadd.f32 %v679, %v764
        %v766 = vpop.f32.mrf.mxu0
        %v767 = vadd.f32 %v683, %v766
        %768 = vmatprep.mubr.f32.mxu0 0.0
        %769 = vmatmul.mubr.f32.gmra.mxu0 %v601
        %v770 = vpop.f32.mrf.mxu0
        %v771 = vadd.f32 %v679, %v770
        %v772 = vpop.f32.mrf.mxu0
        %v773 = vadd.f32 %v683, %v772
        %774 = vmatprep.mubr.f32.mxu0 0.0
        %775 = vmatmul.mubr.f32.gmra.mxu0 %v603
        %v776 = vpop.f32.mrf.mxu0
        %v777 = vadd.f32 %v679, %v776
        %v778 = vpop.f32.mrf.mxu0
        %v779 = vadd.f32 %v683, %v778
        %780 = vmatprep.mubr.f32.mxu0 0.0
        %781 = vmatmul.mubr.f32.gmra.mxu0 %v605
        %v782 = vpop.f32.mrf.mxu0
        %v783 = vadd.f32 %v679, %v782
        %v784 = vpop.f32.mrf.mxu0
        %v785 = vadd.f32 %v683, %v784
        %786 = vmatprep.mubr.f32.mxu0 0.0
        %787 = vmatmul.mubr.f32.gmra.mxu0 %v607
        %v788 = vpop.f32.mrf.mxu0
        %v789 = vadd.f32 %v679, %v788
        %v790 = vpop.f32.mrf.mxu0
        %v791 = vadd.f32 %v683, %v790
        %792 = vmatprep.mubr.f32.mxu0 0.0
        %793 = vmatmul.mubr.f32.gmra.mxu0 %v609
        %v794 = vpop.f32.mrf.mxu0
        %v795 = vadd.f32 %v679, %v794
        %v796 = vpop.f32.mrf.mxu0
        %v797 = vadd.f32 %v683, %v796
        %798 = vmatprep.mubr.f32.mxu0 0.0
        %799 = vmatmul.mubr.f32.gmra.mxu0 %v611
        %v800 = vpop.f32.mrf.mxu0
        %v801 = vadd.f32 %v679, %v800
        %v802 = vpop.f32.mrf.mxu0
        %v803 = vadd.f32 %v683, %v802
        %804 = vmatprep.mubr.f32.mxu0 0.0
        %805 = vmatmul.mubr.f32.gmra.mxu0 %v613
        %v806 = vpop.f32.mrf.mxu0
        %v807 = vadd.f32 %v679, %v806
        %v808 = vpop.f32.mrf.mxu0
        %v809 = vadd.f32 %v683, %v808
        %810 = vmatprep.mubr.f32.mxu0 0.0
        %811 = vmatmul.mubr.f32.gmra.mxu0 %v615
        %v812 = vpop.f32.mrf.mxu0
        %v813 = vadd.f32 %v679, %v812
        %v814 = vpop.f32.mrf.mxu0
        %v815 = vadd.f32 %v683, %v814
        %816 = vmatprep.mubr.f32.mxu0 0.0
        %817 = vmatmul.mubr.f32.gmra.mxu0 %v617
        %v818 = vpop.f32.mrf.mxu0
        %v819 = vadd.f32 %v679, %v818
        %v820 = vpop.f32.mrf.mxu0
        %v821 = vadd.f32 %v683, %v820
        %822 = vmatprep.mubr.f32.mxu0 0.0
        %823 = vmatmul.mubr.f32.gmra.mxu0 %v619
        %v824 = vpop.f32.mrf.mxu0
        %v825 = vadd.f32 %v679, %v824
        %v826 = vpop.f32.mrf.mxu0
        %v827 = vadd.f32 %v683, %v826
        %828 = vmatprep.mubr.f32.mxu0 0.0
        %829 = vmatmul.mubr.f32.gmra.mxu0 %v621
        %v830 = vpop.f32.mrf.mxu0
        %v831 = vadd.f32 %v679, %v830
        %v832 = vpop.f32.mrf.mxu0
        %v833 = vadd.f32 %v683, %v832
        %834 = vmatprep.mubr.f32.mxu0 0.0
        %835 = vmatmul.mubr.f32.gmra.mxu0 %v623
        %v836 = vpop.f32.mrf.mxu0
        %v837 = vadd.f32 %v679, %v836
        %v838 = vpop.f32.mrf.mxu0
        %v839 = vadd.f32 %v683, %v838
        %840 = vmatprep.mubr.f32.mxu0 0.0
        %841 = vmatmul.mubr.f32.gmra.mxu0 %v625
        %v842 = vpop.f32.mrf.mxu0
        %v843 = vadd.f32 %v679, %v842
        %v844 = vpop.f32.mrf.mxu0
        %v845 = vadd.f32 %v683, %v844
        %846 = vdwg.mxu0
        %v847 = vsub.f32 0.0, %v753
        %v848 = vsub.f32 0.0, %v755
        %v849 = vsub.f32 0.0, %v759
        %v850 = vsub.f32 0.0, %v761
        %v851 = vsub.f32 0.0, %v765
        %v852 = vsub.f32 0.0, %v767
        %v853 = vsub.f32 0.0, %v771
        %v854 = vsub.f32 0.0, %v773
        %v855 = vsub.f32 0.0, %v777
        %v856 = vsub.f32 0.0, %v779
        %v857 = vsub.f32 0.0, %v783
        %v858 = vsub.f32 0.0, %v785
        %v859 = vsub.f32 0.0, %v789
        %v860 = vsub.f32 0.0, %v791
        %v861 = vsub.f32 0.0, %v795
        %v862 = vsub.f32 0.0, %v797
        %v863 = vsub.f32 0.0, %v801
        %v864 = vsub.f32 0.0, %v803
        %v865 = vsub.f32 0.0, %v807
        %v866 = vsub.f32 0.0, %v809
        %v867 = vsub.f32 0.0, %v813
        %v868 = vsub.f32 0.0, %v815
        %v869 = vsub.f32 0.0, %v819
        %v870 = vsub.f32 0.0, %v821
        %v871 = vsub.f32 0.0, %v825
        %v872 = vsub.f32 0.0, %v827
        %v873 = vsub.f32 0.0, %v831
        %v874 = vsub.f32 0.0, %v833
        %v875 = vsub.f32 0.0, %v837
        %v876 = vsub.f32 0.0, %v839
        %v877 = vsub.f32 0.0, %v843
        %v878 = vsub.f32 0.0, %v845
        %v879 = vmul.f32 %v847, 1.442695
        %v880 = vpow.pop %v879
        %v881 = vmul.f32 %v848, 1.442695
        %v882 = vpow.pop %v881
        %v883 = vmul.f32 %v849, 1.442695
        %v884 = vpow.pop %v883
        %v885 = vmul.f32 %v850, 1.442695
        %v886 = vpow.pop %v885
        %v887 = vmul.f32 %v851, 1.442695
        %v888 = vpow.pop %v887
        %v889 = vmul.f32 %v852, 1.442695
        %v890 = vpow.pop %v889
        %v891 = vmul.f32 %v853, 1.442695
        %v892 = vpow.pop %v891
        %v893 = vmul.f32 %v854, 1.442695
        %v894 = vpow.pop %v893
        %v895 = vmul.f32 %v855, 1.442695
        %v896 = vpow.pop %v895
        %v897 = vmul.f32 %v856, 1.442695
        %v898 = vpow.pop %v897
        %v899 = vmul.f32 %v857, 1.442695
        %v900 = vpow.pop %v899
        %v901 = vmul.f32 %v858, 1.442695
        %v902 = vpow.pop %v901
        %v903 = vmul.f32 %v859, 1.442695
        %v904 = vpow.pop %v903
        %v905 = vmul.f32 %v860, 1.442695
        %v906 = vpow.pop %v905
        %v907 = vmul.f32 %v861, 1.442695
        %v908 = vpow.pop %v907
        %v909 = vmul.f32 %v862, 1.442695
        %v910 = vpow.pop %v909
        %v911 = vmul.f32 %v863, 1.442695
        %v912 = vpow.pop %v911
        %v913 = vmul.f32 %v864, 1.442695
        %v914 = vpow.pop %v913
        %v915 = vmul.f32 %v865, 1.442695
        %v916 = vpow.pop %v915
        %v917 = vmul.f32 %v866, 1.442695
        %v918 = vpow.pop %v917
        %v919 = vmul.f32 %v867, 1.442695
        %v920 = vpow.pop %v919
        %v921 = vmul.f32 %v868, 1.442695
        %v922 = vpow.pop %v921
        %v923 = vmul.f32 %v869, 1.442695
        %v924 = vpow.pop %v923
        %v925 = vmul.f32 %v870, 1.442695
        %v926 = vpow.pop %v925
        %v927 = vmul.f32 %v871, 1.442695
        %v928 = vpow.pop %v927
        %v929 = vmul.f32 %v872, 1.442695
        %v930 = vpow.pop %v929
        %v931 = vmul.f32 %v873, 1.442695
        %v932 = vpow.pop %v931
        %v933 = vmul.f32 %v874, 1.442695
        %v934 = vpow.pop %v933
        %v935 = vmul.f32 %v875, 1.442695
        %v936 = vpow.pop %v935
        %v937 = vmul.f32 %v876, 1.442695
        %v938 = vpow.pop %v937
        %v939 = vmul.f32 %v877, 1.442695
        %v940 = vpow.pop %v939
        %v941 = vmul.f32 %v878, 1.442695
        %v942 = vpow.pop %v941
        %v943 = vadd.f32 %v880, 1.0
        %v944 = vadd.f32 %v882, 1.0
        %v945 = vadd.f32 %v884, 1.0
        %v946 = vadd.f32 %v886, 1.0
        %v947 = vadd.f32 %v888, 1.0
        %v948 = vadd.f32 %v890, 1.0
        %v949 = vadd.f32 %v892, 1.0
        %v950 = vadd.f32 %v894, 1.0
        %v951 = vadd.f32 %v896, 1.0
        %v952 = vadd.f32 %v898, 1.0
        %v953 = vadd.f32 %v900, 1.0
        %v954 = vadd.f32 %v902, 1.0
        %v955 = vadd.f32 %v904, 1.0
        %v956 = vadd.f32 %v906, 1.0
        %v957 = vadd.f32 %v908, 1.0
        %v958 = vadd.f32 %v910, 1.0
        %v959 = vadd.f32 %v912, 1.0
        %v960 = vadd.f32 %v914, 1.0
        %v961 = vadd.f32 %v916, 1.0
        %v962 = vadd.f32 %v918, 1.0
        %v963 = vadd.f32 %v920, 1.0
        %v964 = vadd.f32 %v922, 1.0
        %v965 = vadd.f32 %v924, 1.0
        %v966 = vadd.f32 %v926, 1.0
        %v967 = vadd.f32 %v928, 1.0
        %v968 = vadd.f32 %v930, 1.0
        %v969 = vadd.f32 %v932, 1.0
        %v970 = vadd.f32 %v934, 1.0
        %v971 = vadd.f32 %v936, 1.0
        %v972 = vadd.f32 %v938, 1.0
        %v973 = vadd.f32 %v940, 1.0
        %v974 = vadd.f32 %v942, 1.0
        %v975 = vrcp.pop %v943
        %v976 = vmul.f32 1.0, %v975
        %v977 = vrcp.pop %v944
        %v978 = vmul.f32 1.0, %v977
        %v979 = vrcp.pop %v945
        %v980 = vmul.f32 1.0, %v979
        %v981 = vrcp.pop %v946
        %v982 = vmul.f32 1.0, %v981
        %v983 = vrcp.pop %v947
        %v984 = vmul.f32 1.0, %v983
        %v985 = vrcp.pop %v948
        %v986 = vmul.f32 1.0, %v985
        %v987 = vrcp.pop %v949
        %v988 = vmul.f32 1.0, %v987
        %v989 = vrcp.pop %v950
        %v990 = vmul.f32 1.0, %v989
        %v991 = vrcp.pop %v951
        %v992 = vmul.f32 1.0, %v991
        %v993 = vrcp.pop %v952
        %v994 = vmul.f32 1.0, %v993
        %v995 = vrcp.pop %v953
        %v996 = vmul.f32 1.0, %v995
        %v997 = vrcp.pop %v954
        %v998 = vmul.f32 1.0, %v997
        %v999 = vrcp.pop %v955
        %v1000 = vmul.f32 1.0, %v999
        %v1001 = vrcp.pop %v956
        %v1002 = vmul.f32 1.0, %v1001
        %v1003 = vrcp.pop %v957
        %v1004 = vmul.f32 1.0, %v1003
        %v1005 = vrcp.pop %v958
        %v1006 = vmul.f32 1.0, %v1005
        %v1007 = vrcp.pop %v959
        %v1008 = vmul.f32 1.0, %v1007
        %v1009 = vrcp.pop %v960
        %v1010 = vmul.f32 1.0, %v1009
        %v1011 = vrcp.pop %v961
        %v1012 = vmul.f32 1.0, %v1011
        %v1013 = vrcp.pop %v962
        %v1014 = vmul.f32 1.0, %v1013
        %v1015 = vrcp.pop %v963
        %v1016 = vmul.f32 1.0, %v1015
        %v1017 = vrcp.pop %v964
        %v1018 = vmul.f32 1.0, %v1017
        %v1019 = vrcp.pop %v965
        %v1020 = vmul.f32 1.0, %v1019
        %v1021 = vrcp.pop %v966
        %v1022 = vmul.f32 1.0, %v1021
        %v1023 = vrcp.pop %v967
        %v1024 = vmul.f32 1.0, %v1023
        %v1025 = vrcp.pop %v968
        %v1026 = vmul.f32 1.0, %v1025
        %v1027 = vrcp.pop %v969
        %v1028 = vmul.f32 1.0, %v1027
        %v1029 = vrcp.pop %v970
        %v1030 = vmul.f32 1.0, %v1029
        %v1031 = vrcp.pop %v971
        %v1032 = vmul.f32 1.0, %v1031
        %v1033 = vrcp.pop %v972
        %v1034 = vmul.f32 1.0, %v1033
        %v1035 = vrcp.pop %v973
        %v1036 = vmul.f32 1.0, %v1035
        %v1037 = vrcp.pop %v974
        %v1038 = vmul.f32 1.0, %v1037
        %1039 = vst [vmem:[%s310] sm:$0xff] %v976
        %1040 = vst [vmem:[%s310 + $0x8] sm:$0xff] %v978
        %1041 = vst [vmem:[%s310 + $0x10] sm:$0xff] %v980
        %1042 = vst [vmem:[%s310 + $0x18] sm:$0xff] %v982
        %1043 = vst [vmem:[%s310 + $0x20] sm:$0xff] %v984
        %1044 = vst [vmem:[%s310 + $0x28] sm:$0xff] %v986
        %1045 = vst [vmem:[%s310 + $0x30] sm:$0xff] %v988
        %1046 = vst [vmem:[%s310 + $0x38] sm:$0xff] %v990
        %1047 = vst [vmem:[%s310 + $0x40] sm:$0xff] %v992
        %1048 = vst [vmem:[%s310 + $0x48] sm:$0xff] %v994
        %1049 = vst [vmem:[%s310 + $0x50] sm:$0xff] %v996
        %1050 = vst [vmem:[%s310 + $0x58] sm:$0xff] %v998
        %1051 = vst [vmem:[%s310 + $0x60] sm:$0xff] %v1000
        %1052 = vst [vmem:[%s310 + $0x68] sm:$0xff] %v1002
        %1053 = vst [vmem:[%s310 + $0x70] sm:$0xff] %v1004
        %1054 = vst [vmem:[%s310 + $0x78] sm:$0xff] %v1006
        %1055 = vst [vmem:[%s310 + $0x80] sm:$0xff] %v1008
        %1056 = vst [vmem:[%s310 + $0x88] sm:$0xff] %v1010
        %1057 = vst [vmem:[%s310 + $0x90] sm:$0xff] %v1012
        %1058 = vst [vmem:[%s310 + $0x98] sm:$0xff] %v1014
        %1059 = vst [vmem:[%s310 + $0xa0] sm:$0xff] %v1016
        %1060 = vst [vmem:[%s310 + $0xa8] sm:$0xff] %v1018
        %1061 = vst [vmem:[%s310 + $0xb0] sm:$0xff] %v1020
        %1062 = vst [vmem:[%s310 + $0xb8] sm:$0xff] %v1022
        %1063 = vst [vmem:[%s310 + $0xc0] sm:$0xff] %v1024
        %1064 = vst [vmem:[%s310 + $0xc8] sm:$0xff] %v1026
        %1065 = vst [vmem:[%s310 + $0xd0] sm:$0xff] %v1028
        %1066 = vst [vmem:[%s310 + $0xd8] sm:$0xff] %v1030
        %1067 = vst [vmem:[%s310 + $0xe0] sm:$0xff] %v1032
        %1068 = vst [vmem:[%s310 + $0xe8] sm:$0xff] %v1034
        %1069 = vst [vmem:[%s310 + $0xf0] sm:$0xff] %v1036
        %1070 = vst [vmem:[%s310 + $0xf8] sm:$0xff] %v1038
        %s1071 = sand.u32 %s146, 1
        %s1072 = scalar_lea.sflag [#allocation4], %s1071
        %s1073 = sand.u32 %s146, 1
        %s1074 = smul.addr %s1073, 128
        %s1075 = scalar_lea.vmem [#allocation8], %s1074
        %s1076 = sand.u32 %s172, 1
        %s1077 = scalar_lea.sflag [#allocation10], %s1076
        %s1078 = sand.u32 %s172, 1
        %s1079 = smul.addr %s1078, 256
        %s1080 = scalar_lea.vmem [#allocation9], %s1079
        // Predicated region
        $region53: #{tpu_custom_call.1} parent=39 // pred_check
          %p1081 = pneg %p156
        $region54: #{tpu_custom_call.1} parent=39 // pred_check_branch
          %1083 = sbr.rel (%p1081) target = $region56
        $region55: #{tpu_custom_call.1} parent=39 // pred_region
          %s1084 = smul.u32 16, %s28
          %s1086 = ssub.s32 2048, 2048
          %1087 = vsyncadd %s1072, %s1086
          %s1088 = smul.addr %s1084, 128
          %s1089 = scalar_lea.hbm %s5, %s1088
          %s1090 = sshll.u32 %s1075, 4
          %s1091 = int_to_ptr.vmem [resolvable:$true] %s1090
          %1096 = dma.vmem_to_hbm [thread:$0]  %s1091, 2048, %s1089, %s1072, 128, 128, 8
        $region56: #{tpu_custom_call.1} parent=39 // pred_fallthru
          _
        // Predicated region
        $region57: #{tpu_custom_call.1} parent=39 // pred_check
          %p1097 = pneg %p182
        $region58: #{tpu_custom_call.1} parent=39 // pred_check_branch
          %1099 = sbr.rel (%p1097) target = $region60
        $region59: #{tpu_custom_call.1} parent=39 // pred_region
          %s1100 = smul.u32 16, %s28
          %s1102 = ssub.s32 4096, 4096
          %1103 = vsyncadd %s1077, %s1102
          %s1104 = smul.addr %s1100, 2
          %s1105 = smul.addr %s1104, 128
          %s1106 = scalar_lea.hbm %s6, %s1105
          %s1107 = sshll.u32 %s1080, 4
          %s1108 = int_to_ptr.vmem [resolvable:$true] %s1107
          %1113 = dma.vmem_to_hbm [thread:$0]  %s1108, 4096, %s1106, %s1077, 256, 256, 16
        $region60: #{tpu_custom_call.1} parent=39 // pred_fallthru
          _
      $region40: #{tpu_custom_call.1} parent=5 // pred_fallthru
        _
      %p1114 = scmp.le.s32.totalorder 2, %s23
      // Predicated region
      $region61: #{tpu_custom_call.1} parent=5 // pred_check
        %p1115 = pneg %p1114
      $region62: #{tpu_custom_call.1} parent=5 // pred_check_branch
        %1117 = sbr.rel (%p1115) target = $region64
      $region63: #{tpu_custom_call.1} parent=5 // pred_region
        %s1118 = ssub.s32 %s23, 2
        // Predicated region
        $region65: #{tpu_custom_call.1} parent=63 // pred_check
          %p1119 = pneg %p162
        $region66: #{tpu_custom_call.1} parent=63 // pred_check_branch
          %1121 = sbr.rel (%p1119) target = $region68
        $region67: #{tpu_custom_call.1} parent=63 // pred_region
          %s1122 = sand.u32 %s147, 1
          %s1123 = scalar_lea.sflag [#allocation4], %s1122
          %s1124 = sand.u32 %s147, 1
          %s1125 = smul.addr %s1124, 128
          %s1126 = scalar_lea.vmem [#allocation8], %s1125
          %1127 = dma.done %s1123, 2048
        $region68: #{tpu_custom_call.1} parent=63 // pred_fallthru
          _
        // Predicated region
        $region69: #{tpu_custom_call.1} parent=63 // pred_check
          %p1128 = pneg %p188
        $region70: #{tpu_custom_call.1} parent=63 // pred_check_branch
          %1130 = sbr.rel (%p1128) target = $region72
        $region71: #{tpu_custom_call.1} parent=63 // pred_region
          %s1131 = sand.u32 %s173, 1
          %s1132 = scalar_lea.sflag [#allocation10], %s1131
          %s1133 = sand.u32 %s173, 1
          %s1134 = smul.addr %s1133, 256
          %s1135 = scalar_lea.vmem [#allocation9], %s1134
          %1136 = dma.done %s1132, 4096
        $region72: #{tpu_custom_call.1} parent=63 // pred_fallthru
          _
      $region64: #{tpu_custom_call.1} parent=5 // pred_fallthru
        _
    $region6: #{tpu_custom_call.1} parent=1 // loop_footer
      %s27 = sadd.s32 1, %s23
    $region7: #{tpu_custom_call.1} parent=1 // loop_footer_branch
      %22 = sbr.rel target = $region3
    $region8: #{tpu_custom_call.1} parent=1 // loop_exit
      _
    %1137 = vsyncpa [#allocation3], 1
    %s1138 = scalar_lea.sflag [#allocation3], 1
    %1139 = vsyncpa %s1138, 1
    %1140 = vsyncpa [#allocation6], 1
    %1141 = vsyncpa [#allocation4], 1
    %s1142 = scalar_lea.sflag [#allocation4], 1
    %1143 = vsyncpa %s1142, 1
    %1144 = vsyncpa [#allocation10], 1
    %s1145 = scalar_lea.sflag [#allocation10], 1
    %1146 = vsyncpa %s1145, 1

</llo_original>
